<compile_context>
chip_gen: v7x
topology: tpu7x:2x2x1
jax: 0.10.0
libtpu: 0.0.40
codegen_flags: <defaults>
</compile_context>

<pallas_src>
import functools

import jax
import jax.numpy as jnp
from jax.experimental import pallas as pl
from jax.experimental.pallas import tpu as pltpu


# ----------------------------- Pallas kernel -------------------------------
def fire_kernel(x_ref, ws_ref, bs_ref, wf_ref, bf_ref, o_ref, spad_ref,
                *, H, W, Cs):
    """One batch element per grid step (grid=(N,), axis marked "parallel")."""
    C1 = ws_ref.shape[0]

    x = x_ref[...]                                    # (H, W, C1) f32
    x_flat = x.reshape(H * W, C1)

    # ---- squeeze 1x1 (+ folded BN) + ReLU: bf16 MXU operands, f32 accumulate.
    s = jnp.dot(x_flat.astype(jnp.bfloat16), ws_ref[...],
                preferred_element_type=jnp.float32)
    s = jnp.maximum(s + bs_ref[...], 0.0)             # (H*W, Cs) f32

    # ---- SAME zero-padding of s for the 3x3 taps. Scratch persists across
    # grid steps / megacore split, so the (tiny) halo is re-zeroed each step.
    spad_ref[...] = jnp.zeros_like(spad_ref)
    spad_ref[1:H + 1, 1:W + 1, :] = s.reshape(H, W, Cs)

    # ---- im2col patch slab (H*W, 9*Cs); taps ordered (dy, dx) row-major to
    # match the fused-weight row layout built in the wrapper.
    taps = [spad_ref[dy:dy + H, dx:dx + W, :].reshape(H * W, Cs)
            for dy in range(3) for dx in range(3)]
    patches = jnp.concatenate(taps, axis=-1).astype(jnp.bfloat16)

    # ---- fused expand1x1 + expand3x3 + concat: ONE matmul, K = 9*Cs,
    # output columns are already [y1 | y3].
    y = jnp.dot(patches, wf_ref[...], preferred_element_type=jnp.float32)
    y = jnp.maximum(y + bf_ref[...], 0.0)             # (H*W, 2*Ce) f32

    # ---- residual add (requires C1 == 2*Ce, as in the module) + single store.
    out = y.reshape(H, W, y.shape[-1]) + x
    o_ref[...] = out.astype(o_ref.dtype)


def fire_unit_pallas(x_nhwc, ws, bs, w1, b1, w3, b3):
    N, H, W, C1 = x_nhwc.shape
    Cs = ws.shape[1]
    Ce = w1.shape[1]
    C2 = 2 * Ce
    assert C1 == C2, "residual connection requires c1 == c2"

    # Fused expand weight: rows ordered (dy, dx, cin) to match the im2col
    # patches. Columns [0:Ce] = expand1x1 (nonzero only at the centre tap),
    # columns [Ce:2Ce] = expand3x3.
    wf = jnp.zeros((9 * Cs, C2), jnp.float32)
    wf = wf.at[4 * Cs:5 * Cs, :Ce].set(w1)            # centre tap (dy=dx=1)
    wf = wf.at[:, Ce:].set(w3.reshape(9 * Cs, Ce))
    bf = jnp.concatenate([b1.reshape(-1), b3.reshape(-1)]).reshape(1, C2)

    ws_b = ws.astype(jnp.bfloat16)                    # MXU operands in bf16
    wf_b = wf.astype(jnp.bfloat16)
    bs2 = bs.reshape(1, Cs).astype(jnp.float32)       # epilogue stays f32
    bf = bf.astype(jnp.float32)

    kernel = functools.partial(fire_kernel, H=H, W=W, Cs=Cs)

    # Advisory cost hint for XLA's scheduler around the custom call.
    flops = 2 * N * H * W * (C1 * Cs + 9 * Cs * C2)
    bytes_accessed = (x_nhwc.size + N * H * W * C2) * 4 \
        + (ws_b.size + wf_b.size) * 2 + (bs2.size + bf.size) * 4
    cost = pl.CostEstimate(flops=flops, transcendentals=0,
                           bytes_accessed=bytes_accessed)

    return pl.pallas_call(
        kernel,
        out_shape=jax.ShapeDtypeStruct((N, H, W, C2), x_nhwc.dtype),
        grid_spec=pltpu.PrefetchScalarGridSpec(
            num_scalar_prefetch=0,
            grid=(N,),
            in_specs=[
                pl.BlockSpec((None, H, W, C1), lambda n: (n, 0, 0, 0)),
                pl.BlockSpec((C1, Cs), lambda n: (0, 0)),        # resident
                pl.BlockSpec((1, Cs), lambda n: (0, 0)),         # resident
                pl.BlockSpec((9 * Cs, C2), lambda n: (0, 0)),    # resident
                pl.BlockSpec((1, C2), lambda n: (0, 0)),         # resident
            ],
            out_specs=pl.BlockSpec((None, H, W, C2), lambda n: (n, 0, 0, 0)),
            scratch_shapes=[pltpu.VMEM((H + 2, W + 2, Cs), jnp.float32)],
        ),
        compiler_params=pltpu.CompilerParams(
            dimension_semantics=("parallel",),        # megacore on v7x
            vmem_limit_bytes=32 * 1024 * 1024),
        cost_estimate=cost,
    )(x_nhwc, ws_b, bs2, wf_b, bf)


# ------------------------------ glue / params ------------------------------
def fold_bn(w_oihw, gamma, beta, mean, var, eps=1e-5):
    """Fold eval-mode BatchNorm into a bias-free conv. w: (Cout, Cin, kh, kw)."""
    scale = gamma / jnp.sqrt(var + eps)
    w_f = w_oihw * scale[:, None, None, None]
    b_f = beta - mean * scale
    return w_f, b_f


def make_params(key, c1, c2, e=0.125):
    squeeze_c = int(c2 * e)
    expand_c = c2 // 2
    ks = jax.random.split(key, 6)

    def conv_w(k, cout, cin, kk):
        return jax.random.normal(k, (cout, cin, kk, kk), jnp.float32) * 0.1

    def bn(k, c):
        g = 1.0 + 0.1 * jax.random.normal(jax.random.fold_in(k, 0), (c,), jnp.float32)
        b = 0.1 * jax.random.normal(jax.random.fold_in(k, 1), (c,), jnp.float32)
        m = 0.1 * jax.random.normal(jax.random.fold_in(k, 2), (c,), jnp.float32)
        v = jnp.abs(jax.random.normal(jax.random.fold_in(k, 3), (c,), jnp.float32)) + 0.5
        return g, b, m, v

    w_sq = conv_w(ks[0], squeeze_c, c1, 1)
    w_sq, b_sq = fold_bn(w_sq, *bn(ks[1], squeeze_c))
    w_e1 = conv_w(ks[2], expand_c, squeeze_c, 1)
    w_e1, b_e1 = fold_bn(w_e1, *bn(ks[3], expand_c))
    w_e3 = conv_w(ks[4], expand_c, squeeze_c, 3)
    w_e3, b_e3 = fold_bn(w_e3, *bn(ks[5], expand_c))

    # reorder for the NHWC kernel
    ws = jnp.transpose(w_sq[:, :, 0, 0], (1, 0))      # (C1, Cs)
    w1 = jnp.transpose(w_e1[:, :, 0, 0], (1, 0))      # (Cs, Ce)
    w3 = jnp.transpose(w_e3, (2, 3, 1, 0))            # (3, 3, Cs, Ce) HWIO
    return ws, b_sq, w1, b_e1, w3, b_e3


def fire_unit_ref(x_nhwc, ws, bs, w1, b1, w3, b3):
    """Pure-JAX f32 reference (same semantics as the PyTorch module, residual=True)."""
    s = jax.nn.relu(jnp.einsum('nhwc,cd->nhwd', x_nhwc, ws) + bs)
    y1 = jax.nn.relu(jnp.einsum('nhwc,cd->nhwd', s, w1) + b1)
    y3 = jax.lax.conv_general_dilated(
        s, w3, window_strides=(1, 1), padding='SAME',
        dimension_numbers=('NHWC', 'HWIO', 'NHWC'))
    y3 = jax.nn.relu(y3 + b3)
    return jnp.concatenate([y1, y3], axis=-1) + x_nhwc


if __name__ == "__main__":
    key = jax.random.PRNGKey(0)
    k_x, k_p = jax.random.split(key)

    # residual connection requires c1 == c2 (as in the PyTorch module)
    N, C1, H, W = 2, 32, 16, 16
    C2 = 32
    x_nchw = jax.random.normal(k_x, (N, C1, H, W), jnp.float32)
    x_nhwc = jnp.transpose(x_nchw, (0, 2, 3, 1))

    params = make_params(k_p, C1, C2, e=0.125)

    out = fire_unit_pallas(x_nhwc, *params)
    out = jax.block_until_ready(out)

    ref = fire_unit_ref(x_nhwc, *params)
    assert out.shape == (N, H, W, C2)
    # Tolerances account for bf16 MXU operands vs. the all-f32 reference;
    # structural bugs would produce O(0.1-1) errors across most elements.
    max_err = float(jnp.max(jnp.abs(out - ref)))
    mean_err = float(jnp.mean(jnp.abs(out - ref)))
    assert jnp.allclose(out, ref, atol=1e-1, rtol=1e-2), (max_err, mean_err)
    assert mean_err < 2e-2, (max_err, mean_err)

    # back to NCHW if a caller needs the PyTorch layout
    _ = jnp.transpose(out, (0, 3, 1, 2))

    print("KERNEL_OK")
</pallas_src>

<mosaic_0001>
module attributes {stable_mosaic.version = 11 : i64} {
  func.func @fire_kernel(%arg0: i32, %arg1: memref<1x16x16x32xf32, #tpu.memory_space<vmem>>, %arg2: memref<32x4xbf16, #tpu.memory_space<vmem>>, %arg3: memref<1x4xf32, #tpu.memory_space<vmem>>, %arg4: memref<36x32xbf16, #tpu.memory_space<vmem>>, %arg5: memref<1x32xf32, #tpu.memory_space<vmem>>, %arg6: memref<1x16x16x32xf32, #tpu.memory_space<vmem>>, %arg7: memref<18x18x4xf32, #tpu.memory_space<vmem>>) attributes {dimension_semantics = [#tpu.dimension_semantics<parallel>], iteration_bounds = array<i64: 2>, scalar_prefetch = 0 : i64, scratch_operands = 1 : i64, tpu.core_type = #tpu.core_type<tc>, window_params = [{transform_indices = @transform_0, window_bounds = array<i64: 1, 16, 16, 32>}, {pipeline_mode = #tpu.pipeline_mode<synchronous>, transform_indices = @transform_1, window_bounds = array<i64: 32, 4>}, {pipeline_mode = #tpu.pipeline_mode<synchronous>, transform_indices = @transform_2, window_bounds = array<i64: 1, 4>}, {pipeline_mode = #tpu.pipeline_mode<synchronous>, transform_indices = @transform_3, window_bounds = array<i64: 36, 32>}, {pipeline_mode = #tpu.pipeline_mode<synchronous>, transform_indices = @transform_4, window_bounds = array<i64: 1, 32>}, {transform_indices = @transform_5, window_bounds = array<i64: 1, 16, 16, 32>}]} {
    %c0 = arith.constant 0 : index
    %c0_0 = arith.constant 0 : index
    %c0_1 = arith.constant 0 : index
    %c0_2 = arith.constant 0 : index
    %0 = vector.load %arg1[%c0, %c0_0, %c0_1, %c0_2] : memref<1x16x16x32xf32, #tpu.memory_space<vmem>>, vector<1x16x16x32xf32>
    %1 = vector.shape_cast %0 : vector<1x16x16x32xf32> to vector<16x16x32xf32>
    %2 = vector.shape_cast %1 : vector<16x16x32xf32> to vector<256x32xf32>
    %3 = arith.truncf %2 : vector<256x32xf32> to vector<256x32xbf16>
    %c0_3 = arith.constant 0 : index
    %c0_4 = arith.constant 0 : index
    %4 = vector.load %arg2[%c0_3, %c0_4] : memref<32x4xbf16, #tpu.memory_space<vmem>>, vector<32x4xbf16>
    %cst = arith.constant dense<0.000000e+00> : vector<256x4xf32>
    %5 = tpu.matmul %3, %4, %cst {dimension_numbers = #tpu.dot_dimension_numbers<[1], [0], [0], [1], [0, 0, 1, 1], [], []>} : vector<256x32xbf16>, vector<32x4xbf16>, vector<256x4xf32> -> vector<256x4xf32>
    %c0_5 = arith.constant 0 : index
    %c0_6 = arith.constant 0 : index
    %6 = vector.load %arg3[%c0_5, %c0_6] : memref<1x4xf32, #tpu.memory_space<vmem>>, vector<1x4xf32>
    %7 = vector.broadcast %6 : vector<1x4xf32> to vector<256x4xf32>
    %8 = arith.addf %5, %7 : vector<256x4xf32>
    %cst_7 = arith.constant 0.000000e+00 : f32
    %9 = vector.broadcast %cst_7 : f32 to vector<256x4xf32>
    %10 = arith.maximumf %8, %9 : vector<256x4xf32>
    %cst_8 = arith.constant 0.000000e+00 : f32
    %11 = vector.broadcast %cst_8 : f32 to vector<18x18x4xf32>
    %c0_9 = arith.constant 0 : index
    %c0_10 = arith.constant 0 : index
    %c0_11 = arith.constant 0 : index
    %12 = vector.load %arg7[%c0_9, %c0_10, %c0_11] : memref<18x18x4xf32, #tpu.memory_space<vmem>>, vector<18x18x4xf32>
    tpu.vector_store %arg7[%c0_9, %c0_10, %c0_11], %11 {strides = array<i32>} : memref<18x18x4xf32, #tpu.memory_space<vmem>>, vector<18x18x4xf32>,
    %13 = vector.shape_cast %10 : vector<256x4xf32> to vector<16x16x4xf32>
    %c1 = arith.constant 1 : index
    %c1_12 = arith.constant 1 : index
    %c0_13 = arith.constant 0 : index
    %14 = vector.load %arg7[%c1, %c1_12, %c0_13] : memref<18x18x4xf32, #tpu.memory_space<vmem>>, vector<16x16x4xf32>
    tpu.vector_store %arg7[%c1, %c1_12, %c0_13], %13 {strides = array<i32>} : memref<18x18x4xf32, #tpu.memory_space<vmem>>, vector<16x16x4xf32>,
    %c0_14 = arith.constant 0 : index
    %c0_15 = arith.constant 0 : index
    %c0_16 = arith.constant 0 : index
    %15 = vector.load %arg7[%c0_14, %c0_15, %c0_16] : memref<18x18x4xf32, #tpu.memory_space<vmem>>, vector<16x16x4xf32>
    %16 = vector.shape_cast %15 : vector<16x16x4xf32> to vector<256x4xf32>
    %c0_17 = arith.constant 0 : index
    %c1_18 = arith.constant 1 : index
    %c0_19 = arith.constant 0 : index
    %17 = vector.load %arg7[%c0_17, %c1_18, %c0_19] : memref<18x18x4xf32, #tpu.memory_space<vmem>>, vector<16x16x4xf32>
    %18 = vector.shape_cast %17 : vector<16x16x4xf32> to vector<256x4xf32>
    %c0_20 = arith.constant 0 : index
    %c2 = arith.constant 2 : index
    %c0_21 = arith.constant 0 : index
    %19 = vector.load %arg7[%c0_20, %c2, %c0_21] : memref<18x18x4xf32, #tpu.memory_space<vmem>>, vector<16x16x4xf32>
    %20 = vector.shape_cast %19 : vector<16x16x4xf32> to vector<256x4xf32>
    %c1_22 = arith.constant 1 : index
    %c0_23 = arith.constant 0 : index
    %c0_24 = arith.constant 0 : index
    %21 = vector.load %arg7[%c1_22, %c0_23, %c0_24] : memref<18x18x4xf32, #tpu.memory_space<vmem>>, vector<16x16x4xf32>
    %22 = vector.shape_cast %21 : vector<16x16x4xf32> to vector<256x4xf32>
    %c1_25 = arith.constant 1 : index
    %c1_26 = arith.constant 1 : index
    %c0_27 = arith.constant 0 : index
    %23 = vector.load %arg7[%c1_25, %c1_26, %c0_27] : memref<18x18x4xf32, #tpu.memory_space<vmem>>, vector<16x16x4xf32>
    %24 = vector.shape_cast %23 : vector<16x16x4xf32> to vector<256x4xf32>
    %c1_28 = arith.constant 1 : index
    %c2_29 = arith.constant 2 : index
    %c0_30 = arith.constant 0 : index
    %25 = vector.load %arg7[%c1_28, %c2_29, %c0_30] : memref<18x18x4xf32, #tpu.memory_space<vmem>>, vector<16x16x4xf32>
    %26 = vector.shape_cast %25 : vector<16x16x4xf32> to vector<256x4xf32>
    %c2_31 = arith.constant 2 : index
    %c0_32 = arith.constant 0 : index
    %c0_33 = arith.constant 0 : index
    %27 = vector.load %arg7[%c2_31, %c0_32, %c0_33] : memref<18x18x4xf32, #tpu.memory_space<vmem>>, vector<16x16x4xf32>
    %28 = vector.shape_cast %27 : vector<16x16x4xf32> to vector<256x4xf32>
    %c2_34 = arith.constant 2 : index
    %c1_35 = arith.constant 1 : index
    %c0_36 = arith.constant 0 : index
    %29 = vector.load %arg7[%c2_34, %c1_35, %c0_36] : memref<18x18x4xf32, #tpu.memory_space<vmem>>, vector<16x16x4xf32>
    %30 = vector.shape_cast %29 : vector<16x16x4xf32> to vector<256x4xf32>
    %c2_37 = arith.constant 2 : index
    %c2_38 = arith.constant 2 : index
    %c0_39 = arith.constant 0 : index
    %31 = vector.load %arg7[%c2_37, %c2_38, %c0_39] : memref<18x18x4xf32, #tpu.memory_space<vmem>>, vector<16x16x4xf32>
    %32 = vector.shape_cast %31 : vector<16x16x4xf32> to vector<256x4xf32>
    %33 = tpu.concatenate %16, %18, %20, %22, %24, %26, %28, %30, %32 in 1 : vector<256x4xf32>, vector<256x4xf32>, vector<256x4xf32>, vector<256x4xf32>, vector<256x4xf32>, vector<256x4xf32>, vector<256x4xf32>, vector<256x4xf32>, vector<256x4xf32> -> vector<256x36xf32>
    %34 = arith.truncf %33 : vector<256x36xf32> to vector<256x36xbf16>
    %c0_40 = arith.constant 0 : index
    %c0_41 = arith.constant 0 : index
    %35 = vector.load %arg4[%c0_40, %c0_41] : memref<36x32xbf16, #tpu.memory_space<vmem>>, vector<36x32xbf16>
    %cst_42 = arith.constant dense<0.000000e+00> : vector<256x32xf32>
    %36 = tpu.matmul %34, %35, %cst_42 {dimension_numbers = #tpu.dot_dimension_numbers<[1], [0], [0], [1], [0, 0, 1, 1], [], []>} : vector<256x36xbf16>, vector<36x32xbf16>, vector<256x32xf32> -> vector<256x32xf32>
    %c0_43 = arith.constant 0 : index
    %c0_44 = arith.constant 0 : index
    %37 = vector.load %arg5[%c0_43, %c0_44] : memref<1x32xf32, #tpu.memory_space<vmem>>, vector<1x32xf32>
    %38 = vector.broadcast %37 : vector<1x32xf32> to vector<256x32xf32>
    %39 = arith.addf %36, %38 : vector<256x32xf32>
    %cst_45 = arith.constant 0.000000e+00 : f32
    %40 = vector.broadcast %cst_45 : f32 to vector<256x32xf32>
    %41 = arith.maximumf %39, %40 : vector<256x32xf32>
    %42 = vector.shape_cast %41 : vector<256x32xf32> to vector<16x16x32xf32>
    %43 = arith.addf %42, %1 : vector<16x16x32xf32>
    %c0_46 = arith.constant 0 : index
    %c0_47 = arith.constant 0 : index
    %c0_48 = arith.constant 0 : index
    %c0_49 = arith.constant 0 : index
    %44 = vector.load %arg6[%c0_46, %c0_47, %c0_48, %c0_49] : memref<1x16x16x32xf32, #tpu.memory_space<vmem>>, vector<1x16x16x32xf32>
    %45 = vector.shape_cast %44 : vector<1x16x16x32xf32> to vector<16x16x32xf32>
    %46 = vector.shape_cast %43 : vector<16x16x32xf32> to vector<1x16x16x32xf32>
    tpu.vector_store %arg6[%c0_46, %c0_47, %c0_48, %c0_49], %46 {strides = array<i32>} : memref<1x16x16x32xf32, #tpu.memory_space<vmem>>, vector<1x16x16x32xf32>,
    return
  }
  func.func @transform_0(%arg0: i32) -> (i32, i32, i32, i32) {
    %c0_i32 = arith.constant 0 : i32
    %c0_i32_0 = arith.constant 0 : i32
    %c0_i32_1 = arith.constant 0 : i32
    %c0_i32_2 = arith.constant 0 : i32
    return %arg0, %c0_i32, %c0_i32_0, %c0_i32_1 : i32, i32, i32, i32
  }
  func.func @transform_1(%arg0: i32) -> (i32, i32) {
    %c0_i32 = arith.constant 0 : i32
    %c0_i32_0 = arith.constant 0 : i32
    %c0_i32_1 = arith.constant 0 : i32
    return %c0_i32, %c0_i32_0 : i32, i32
  }
  func.func @transform_2(%arg0: i32) -> (i32, i32) {
    %c0_i32 = arith.constant 0 : i32
    %c0_i32_0 = arith.constant 0 : i32
    %c0_i32_1 = arith.constant 0 : i32
    return %c0_i32, %c0_i32_0 : i32, i32
  }
  func.func @transform_3(%arg0: i32) -> (i32, i32) {
    %c0_i32 = arith.constant 0 : i32
    %c0_i32_0 = arith.constant 0 : i32
    %c0_i32_1 = arith.constant 0 : i32
    return %c0_i32, %c0_i32_0 : i32, i32
  }
  func.func @transform_4(%arg0: i32) -> (i32, i32) {
    %c0_i32 = arith.constant 0 : i32
    %c0_i32_0 = arith.constant 0 : i32
    %c0_i32_1 = arith.constant 0 : i32
    return %c0_i32, %c0_i32_0 : i32, i32
  }
  func.func @transform_5(%arg0: i32) -> (i32, i32, i32, i32) {
    %c0_i32 = arith.constant 0 : i32
    %c0_i32_0 = arith.constant 0 : i32
    %c0_i32_1 = arith.constant 0 : i32
    %c0_i32_2 = arith.constant 0 : i32
    return %arg0, %c0_i32, %c0_i32_0, %c0_i32_1 : i32, i32, i32, i32
  }
}

</mosaic_0001>

<llo_original>
// kernel: tpu_custom_call.1
$region0: #{tpu_custom_call.1}
  #allocation0 [shape = 'u32[]', space=smem, size = 0x4, offset = 0x4, fixed_abs, tag = 'smem constant byte address 0x4 - core index']
  #allocation1 [shape = 'u32[144,128]{1,0:T(1,128)}', space=vmem, size = 0x12000, scoped, tag = 'internal scratch']
  #allocation2 [shape = 'f32[18,18,4]{2,1,0:T(8,128)}', space=vmem, size = 0x36000, scoped, tag = 'scratch operand']
  %s0 = inlined_call_operand.hbm [shape: f32[2,16,16,32], index: 0, kind: input, shape index: {}]
  %s1 = inlined_call_operand.vmem [shape: bf16[32,4], index: 1, kind: input, shape index: {}]
  %s2 = inlined_call_operand.vmem [shape: f32[1,4], index: 2, kind: input, shape index: {}]
  %s3 = inlined_call_operand.vmem [shape: bf16[36,32], index: 3, kind: input, shape index: {}]
  %s4 = inlined_call_operand.vmem [shape: f32[1,32], index: 4, kind: input, shape index: {}]
  %s5 = inlined_call_operand.hbm [shape: f32[2,16,16,32], index: 5, kind: output, shape index: {}]
  %s6 = sld [smem:[#allocation0]]
  $region57: #{tpu_custom_call.1} parent=0
    _
  %s8 = ssub.s32 1, %s6
  %s9 = scalar_select 0, %s8, %s6
  $region1: #{tpu_custom_call.1} parent=0
    #allocation3 [shape = 'u8[262144]{0}', space=vmem, size = 0x40000, scoped, tag = 'input window, operand 0']
    #allocation4 [shape = 's32[2]{0}', space=sflag, size = 0x8, scoped, tag = 'scoped memory for tpu_custom_call.1']
    #allocation5 [shape = 's32[2]{0}', space=sflag, size = 0x8, scoped, tag = 'scoped memory for tpu_custom_call.1']
    #allocation6 [shape = 'u8[262144]{0}', space=vmem, size = 0x40000, scoped, tag = 'output window, operand 0']
    %10 = vsyncpa [#allocation4], 0
    %s11 = scalar_lea.sflag [#allocation4], 1
    %12 = vsyncpa %s11, 0
    %13 = vsyncpa [#allocation5], 0
    %s14 = scalar_lea.sflag [#allocation5], 1
    %15 = vsyncpa %s14, 0
    loop: start=0, step=1, limit=4
    $region2: #{tpu_custom_call.1} parent=1 // loop_pre_header
      _
    $region3: #{tpu_custom_call.1} parent=1 // loop_header
      %s17 = sphi 0, %s21
      %p18 = scmp.ge.s32.totalorder %s17, 4
      %s27 = sphi 0, %s29
      %s30 = sphi 0, %s27
      %s31 = sphi 0, %s30
      %s47 = sphi 0, %s31
      %s51 = sphi 0, %s51
      %s53 = sphi 0, %s51
      %s54 = sphi 0, %s53
      %s68 = sphi 0, %s54
      %s72 = sphi 0, %s72
      %s74 = sphi 0, %s72
      %s75 = sphi 0, %s74
      %s89 = sphi 0, %s75
      %s93 = sphi 0, %s93
      %s95 = sphi 0, %s93
      %s96 = sphi 0, %s95
      %s110 = sphi 0, %s96
      %s114 = sphi 0, %s114
      %s116 = sphi 0, %s114
      %s117 = sphi 0, %s116
      %s131 = sphi 0, %s117
      %s137 = sphi 0, %s139
      %s140 = sphi 0, %s137
      %s141 = sphi 0, %s140
      %s157 = sphi 0, %s141
    $region4: #{tpu_custom_call.1} parent=1 // loop_header_branch
      %20 = sbr.rel (%p18) target = $region8
    $region5: #{tpu_custom_call.1} parent=1 // loop_body
      %s22 = ssub.s32 %s17, 1
      %s23 = ssub.s32 %s17, 2
      %s24 = sadd.s32 %s17, 1
      %s25 = ssub.s32 %s17, %s24
      %p26 = scmp.eq.s32.totalorder %s25, 0
      %s28 = sadd.s32 %s27, 1
      %s29 = scalar_select %p26, %s27, %s28
      %p32 = pneg %p26
      %p33 = scmp.eq.s32.totalorder %s17, 1
      %p34 = por %p32, %p33
      %p35 = scmp.ne.s32.totalorder %s27, %s30
      %p36 = scmp.eq.s32.totalorder %s17, 0
      %p37 = por %p35, %p36
      %p38 = scmp.ne.s32.totalorder %s27, %s30
      %p39 = scmp.eq.s32.totalorder %s22, 1
      %p40 = por %p38, %p39
      %p41 = scmp.ne.s32.totalorder %s30, %s31
      %p42 = scmp.eq.s32.totalorder %s22, 0
      %p43 = por %p41, %p42
      %p44 = scmp.ne.s32.totalorder %s30, %s31
      %p45 = scmp.eq.s32.totalorder %s23, 1
      %p46 = por %p44, %p45
      %p48 = scmp.ne.s32.totalorder %s31, %s47
      %p49 = scmp.eq.s32.totalorder %s23, 0
      %p50 = por %p48, %p49
      %s52 = sadd.s32 %s51, 1
      %p55 = scmp.eq.s32.totalorder %s17, 1
      %p56 = scmp.ne.s32.totalorder %s51, %s53
      %p57 = scmp.eq.s32.totalorder %s17, 0
      %p58 = por %p56, %p57
      %p59 = scmp.ne.s32.totalorder %s51, %s53
      %p60 = scmp.eq.s32.totalorder %s22, 1
      %p61 = por %p59, %p60
      %p62 = scmp.ne.s32.totalorder %s53, %s54
      %p63 = scmp.eq.s32.totalorder %s22, 0
      %p64 = por %p62, %p63
      %p65 = scmp.ne.s32.totalorder %s53, %s54
      %p66 = scmp.eq.s32.totalorder %s23, 1
      %p67 = por %p65, %p66
      %p69 = scmp.ne.s32.totalorder %s54, %s68
      %p70 = scmp.eq.s32.totalorder %s23, 0
      %p71 = por %p69, %p70
      %s73 = sadd.s32 %s72, 1
      %p76 = scmp.eq.s32.totalorder %s17, 1
      %p77 = scmp.ne.s32.totalorder %s72, %s74
      %p78 = scmp.eq.s32.totalorder %s17, 0
      %p79 = por %p77, %p78
      %p80 = scmp.ne.s32.totalorder %s72, %s74
      %p81 = scmp.eq.s32.totalorder %s22, 1
      %p82 = por %p80, %p81
      %p83 = scmp.ne.s32.totalorder %s74, %s75
      %p84 = scmp.eq.s32.totalorder %s22, 0
      %p85 = por %p83, %p84
      %p86 = scmp.ne.s32.totalorder %s74, %s75
      %p87 = scmp.eq.s32.totalorder %s23, 1
      %p88 = por %p86, %p87
      %p90 = scmp.ne.s32.totalorder %s75, %s89
      %p91 = scmp.eq.s32.totalorder %s23, 0
      %p92 = por %p90, %p91
      %s94 = sadd.s32 %s93, 1
      %p97 = scmp.eq.s32.totalorder %s17, 1
      %p98 = scmp.ne.s32.totalorder %s93, %s95
      %p99 = scmp.eq.s32.totalorder %s17, 0
      %p100 = por %p98, %p99
      %p101 = scmp.ne.s32.totalorder %s93, %s95
      %p102 = scmp.eq.s32.totalorder %s22, 1
      %p103 = por %p101, %p102
      %p104 = scmp.ne.s32.totalorder %s95, %s96
      %p105 = scmp.eq.s32.totalorder %s22, 0
      %p106 = por %p104, %p105
      %p107 = scmp.ne.s32.totalorder %s95, %s96
      %p108 = scmp.eq.s32.totalorder %s23, 1
      %p109 = por %p107, %p108
      %p111 = scmp.ne.s32.totalorder %s96, %s110
      %p112 = scmp.eq.s32.totalorder %s23, 0
      %p113 = por %p111, %p112
      %s115 = sadd.s32 %s114, 1
      %p118 = scmp.eq.s32.totalorder %s17, 1
      %p119 = scmp.ne.s32.totalorder %s114, %s116
      %p120 = scmp.eq.s32.totalorder %s17, 0
      %p121 = por %p119, %p120
      %p122 = scmp.ne.s32.totalorder %s114, %s116
      %p123 = scmp.eq.s32.totalorder %s22, 1
      %p124 = por %p122, %p123
      %p125 = scmp.ne.s32.totalorder %s116, %s117
      %p126 = scmp.eq.s32.totalorder %s22, 0
      %p127 = por %p125, %p126
      %p128 = scmp.ne.s32.totalorder %s116, %s117
      %p129 = scmp.eq.s32.totalorder %s23, 1
      %p130 = por %p128, %p129
      %p132 = scmp.ne.s32.totalorder %s117, %s131
      %p133 = scmp.eq.s32.totalorder %s23, 0
      %p134 = por %p132, %p133
      %s135 = ssub.s32 %s17, %s24
      %p136 = scmp.eq.s32.totalorder %s135, 0
      %s138 = sadd.s32 %s137, 1
      %s139 = scalar_select %p136, %s137, %s138
      %p142 = pneg %p136
      %p143 = scmp.eq.s32.totalorder %s17, 1
      %p144 = por %p142, %p143
      %p145 = scmp.ne.s32.totalorder %s137, %s140
      %p146 = scmp.eq.s32.totalorder %s17, 0
      %p147 = por %p145, %p146
      %p148 = scmp.ne.s32.totalorder %s137, %s140
      %p149 = scmp.eq.s32.totalorder %s22, 1
      %p150 = por %p148, %p149
      %p151 = scmp.ne.s32.totalorder %s140, %s141
      %p152 = scmp.eq.s32.totalorder %s22, 0
      %p153 = por %p151, %p152
      %p154 = scmp.ne.s32.totalorder %s140, %s141
      %p155 = scmp.eq.s32.totalorder %s23, 1
      %p156 = por %p154, %p155
      %p158 = scmp.ne.s32.totalorder %s141, %s157
      %p159 = scmp.eq.s32.totalorder %s23, 0
      %p160 = por %p158, %p159
      %p161 = scmp.le.s32.totalorder 1, %s17
      %p162 = scmp.lt.s32.totalorder %s17, 3
      %p163 = pnand %p161, %p162
      %p164 = pneg %p163
      // Predicated region
      $region9: #{tpu_custom_call.1} parent=5 // pred_check
        _
      $region10: #{tpu_custom_call.1} parent=5 // pred_check_branch
        %166 = sbr.rel (%p163) target = $region12
      $region11: #{tpu_custom_call.1} parent=5 // pred_region
        %s167 = ssub.s32 %s17, 1
        // Predicated region
        $region13: #{tpu_custom_call.1} parent=11 // pred_check
          %p168 = pneg %p64
        $region14: #{tpu_custom_call.1} parent=11 // pred_check_branch
          %170 = sbr.rel (%p168) target = $region16
        $region15: #{tpu_custom_call.1} parent=11 // pred_region
          _
        $region16: #{tpu_custom_call.1} parent=11 // pred_fallthru
          _
        // Predicated region
        $region17: #{tpu_custom_call.1} parent=11 // pred_check
          %p171 = pneg %p85
        $region18: #{tpu_custom_call.1} parent=11 // pred_check_branch
          %173 = sbr.rel (%p171) target = $region20
        $region19: #{tpu_custom_call.1} parent=11 // pred_region
          _
        $region20: #{tpu_custom_call.1} parent=11 // pred_fallthru
          _
        // Predicated region
        $region21: #{tpu_custom_call.1} parent=11 // pred_check
          %p174 = pneg %p106
        $region22: #{tpu_custom_call.1} parent=11 // pred_check_branch
          %176 = sbr.rel (%p174) target = $region24
        $region23: #{tpu_custom_call.1} parent=11 // pred_region
          _
        $region24: #{tpu_custom_call.1} parent=11 // pred_fallthru
          _
        // Predicated region
        $region25: #{tpu_custom_call.1} parent=11 // pred_check
          %p177 = pneg %p127
        $region26: #{tpu_custom_call.1} parent=11 // pred_check_branch
          %179 = sbr.rel (%p177) target = $region28
        $region27: #{tpu_custom_call.1} parent=11 // pred_region
          _
        $region28: #{tpu_custom_call.1} parent=11 // pred_fallthru
          _
      $region12: #{tpu_custom_call.1} parent=5 // pred_fallthru
        _
      %p180 = scmp.lt.s32.totalorder %s17, 2
      // Predicated region
      $region29: #{tpu_custom_call.1} parent=5 // pred_check
        %p181 = pneg %p180
      $region30: #{tpu_custom_call.1} parent=5 // pred_check_branch
        %183 = sbr.rel (%p181) target = $region32
      $region31: #{tpu_custom_call.1} parent=5 // pred_region
        // Predicated region
        $region33: #{tpu_custom_call.1} parent=31 // pred_check
          %p184 = pneg %p37
        $region34: #{tpu_custom_call.1} parent=31 // pred_check_branch
          %186 = sbr.rel (%p184) target = $region36
        $region35: #{tpu_custom_call.1} parent=31 // pred_region
          %s187 = sand.u32 %s27, 1
          %s188 = scalar_lea.sflag [#allocation4], %s187
          %s189 = sand.u32 %s27, 1
          %s190 = smul.addr %s189, 256
          %s191 = scalar_lea.vmem [#allocation3], %s190
          %s193 = ssub.s32 4096, 4096
          %194 = vsyncadd %s188, %s193
          %s195 = smul.addr %s17, 32
          %s196 = smul.addr %s195, 128
          %s197 = scalar_lea.hbm %s0, %s196
          %s198 = sshll.u32 %s191, 4
          %s199 = int_to_ptr.vmem [resolvable:$true] %s198
          %204 = dma.hbm_to_vmem [thread:$0]  %s197, 4096, %s199, %s188, 128, 128, 8
        $region36: #{tpu_custom_call.1} parent=31 // pred_fallthru
          _
      $region32: #{tpu_custom_call.1} parent=5 // pred_fallthru
        _
      %p205 = scmp.le.s32.totalorder 1, %s17
      %p206 = scmp.lt.s32.totalorder %s17, 3
      %p207 = pnand %p205, %p206
      %p208 = pneg %p207
      // Predicated region
      $region37: #{tpu_custom_call.1} parent=5 // pred_check
        _
      $region38: #{tpu_custom_call.1} parent=5 // pred_check_branch
        %210 = sbr.rel (%p207) target = $region40
      $region39: #{tpu_custom_call.1} parent=5 // pred_region
        %s211 = ssub.s32 %s17, 1
        %s212 = sand.u32 %s30, 1
        %s213 = scalar_lea.sflag [#allocation4], %s212
        %s214 = sand.u32 %s30, 1
        %s215 = smul.addr %s214, 256
        %s216 = scalar_lea.vmem [#allocation3], %s215
        // Predicated region
        $region41: #{tpu_custom_call.1} parent=39 // pred_check
          %p217 = pneg %p43
        $region42: #{tpu_custom_call.1} parent=39 // pred_check_branch
          %219 = sbr.rel (%p217) target = $region44
        $region43: #{tpu_custom_call.1} parent=39 // pred_region
          %220 = dma.done %s213, 4096
        $region44: #{tpu_custom_call.1} parent=39 // pred_fallthru
          _
        %s221 = sand.u32 %s30, 1
        %s222 = scalar_lea.sflag [#allocation4], %s221
        %s223 = sand.u32 %s30, 1
        %s224 = smul.addr %s223, 256
        %s225 = scalar_lea.vmem [#allocation3], %s224
        %p226 = pneg %p43
        %p227 = pneg %p40
        %p228 = pneg %p64
        %p229 = pneg %p61
        %p230 = pneg %p85
        %p231 = pneg %p82
        %p232 = pneg %p106
        %p233 = pneg %p103
        %p234 = pneg %p127
        %p235 = pneg %p124
        %p236 = pneg %p153
        %p237 = pneg %p150
        %s238 = sand.u32 %s140, 1
        %s239 = scalar_lea.sflag [#allocation5], %s238
        %s240 = sand.u32 %s140, 1
        %s241 = smul.addr %s240, 256
        %s242 = scalar_lea.vmem [#allocation6], %s241
        %v244 = vld [vmem:[%s216] sm:$0xff]
        %v245 = vld [vmem:[%s216 + $0x8] sm:$0xff]
        %v246 = vld [vmem:[%s216 + $0x10] sm:$0xff]
        %v247 = vld [vmem:[%s216 + $0x18] sm:$0xff]
        %v248 = vld [vmem:[%s216 + $0x20] sm:$0xff]
        %v249 = vld [vmem:[%s216 + $0x28] sm:$0xff]
        %v250 = vld [vmem:[%s216 + $0x30] sm:$0xff]
        %v251 = vld [vmem:[%s216 + $0x38] sm:$0xff]
        %v252 = vld [vmem:[%s216 + $0x40] sm:$0xff]
        %v253 = vld [vmem:[%s216 + $0x48] sm:$0xff]
        %v254 = vld [vmem:[%s216 + $0x50] sm:$0xff]
        %v255 = vld [vmem:[%s216 + $0x58] sm:$0xff]
        %v256 = vld [vmem:[%s216 + $0x60] sm:$0xff]
        %v257 = vld [vmem:[%s216 + $0x68] sm:$0xff]
        %v258 = vld [vmem:[%s216 + $0x70] sm:$0xff]
        %v259 = vld [vmem:[%s216 + $0x78] sm:$0xff]
        %v260 = vld [vmem:[%s216 + $0x80] sm:$0xff]
        %v261 = vld [vmem:[%s216 + $0x88] sm:$0xff]
        %v262 = vld [vmem:[%s216 + $0x90] sm:$0xff]
        %v263 = vld [vmem:[%s216 + $0x98] sm:$0xff]
        %v264 = vld [vmem:[%s216 + $0xa0] sm:$0xff]
        %v265 = vld [vmem:[%s216 + $0xa8] sm:$0xff]
        %v266 = vld [vmem:[%s216 + $0xb0] sm:$0xff]
        %v267 = vld [vmem:[%s216 + $0xb8] sm:$0xff]
        %v268 = vld [vmem:[%s216 + $0xc0] sm:$0xff]
        %v269 = vld [vmem:[%s216 + $0xc8] sm:$0xff]
        %v270 = vld [vmem:[%s216 + $0xd0] sm:$0xff]
        %v271 = vld [vmem:[%s216 + $0xd8] sm:$0xff]
        %v272 = vld [vmem:[%s216 + $0xe0] sm:$0xff]
        %v273 = vld [vmem:[%s216 + $0xe8] sm:$0xff]
        %v274 = vld [vmem:[%s216 + $0xf0] sm:$0xff]
        %v275 = vld [vmem:[%s216 + $0xf8] sm:$0xff]
        %v276 = vpack.c.bf16 %v245, %v244
        %v277 = vpack.c.bf16 %v247, %v246
        %v278 = vpack.c.bf16 %v249, %v248
        %v279 = vpack.c.bf16 %v251, %v250
        %v280 = vpack.c.bf16 %v253, %v252
        %v281 = vpack.c.bf16 %v255, %v254
        %v282 = vpack.c.bf16 %v257, %v256
        %v283 = vpack.c.bf16 %v259, %v258
        %v284 = vpack.c.bf16 %v261, %v260
        %v285 = vpack.c.bf16 %v263, %v262
        %v286 = vpack.c.bf16 %v265, %v264
        %v287 = vpack.c.bf16 %v267, %v266
        %v288 = vpack.c.bf16 %v269, %v268
        %v289 = vpack.c.bf16 %v271, %v270
        %v290 = vpack.c.bf16 %v273, %v272
        %v291 = vpack.c.bf16 %v275, %v274
        %v292 = vld [vmem:[%s1] sm:$0xf]
        %v293 = vld [vmem:[%s1 + $0x4] sm:$0xf]
        %v294 = vld [vmem:[%s1 + $0x8] sm:$0xf]
        %v295 = vld [vmem:[%s1 + $0xc] sm:$0xf]
        %v296 = vld [vmem:[%s2] sm:$0x1]
        %v298 = vlaneseq
        %v299 = vshrl.u32 %v298, 7
        %v300 = vsub.s32 0, %v299
        %v301 = vrot.slane %v296, %v300
        %v307 = vunpack.c.l.b16 %v292
        %v308 = vunpack.c.l.b16 %v293
        %v309 = vunpack.c.l.b16 %v294
        %v310 = vunpack.c.l.b16 %v295
        %v311 = vpack.c.b16 %v308, %v307
        %v312 = vpack.c.b16 %v310, %v309
        %vm315 = vcmask 261120
        %v317 = vsel %vm315, %v276, 0
        %v320 = vsel %vm315, %v277, 0
        %v323 = vsel %vm315, %v278, 0
        %v326 = vsel %vm315, %v279, 0
        %v329 = vsel %vm315, %v280, 0
        %v332 = vsel %vm315, %v281, 0
        %v335 = vsel %vm315, %v282, 0
        %v338 = vsel %vm315, %v283, 0
        %v341 = vsel %vm315, %v284, 0
        %v344 = vsel %vm315, %v285, 0
        %v347 = vsel %vm315, %v286, 0
        %v350 = vsel %vm315, %v287, 0
        %v353 = vsel %vm315, %v288, 0
        %v356 = vsel %vm315, %v289, 0
        %v359 = vsel %vm315, %v290, 0
        %v362 = vsel %vm315, %v291, 0
        %364 = vmatprep.subr.bf16.mxu0 0
        %365 = vmatpush1.bf16.msra.mxu0 %v311
        %366 = vmatprep.subr.bf16.mxu0 0
        %367 = vmatpush1.bf16.msra.mxu0 %v312
        %368 = vmatprep.subr.bf16.mxu0 0
        %369 = vmatpush1.bf16.msra.mxu0 0
        %370 = vmatprep.subr.bf16.mxu0 0
        %371 = vmatpush1.bf16.msra.mxu0 0
        %372 = vmatprep.subr.bf16.mxu0 0
        %373 = vmatpush1.bf16.msra.mxu0 0
        %374 = vmatprep.subr.bf16.mxu0 0
        %375 = vmatpush1.bf16.msra.mxu0 0
        %376 = vmatprep.subr.bf16.mxu0 0
        %377 = vmatpush1.bf16.msra.mxu0 0
        %378 = vmatprep.subr.bf16.mxu0 0
        %379 = vmatpush1.bf16.msra.mxu0 0
        %380 = vmatprep.subr.bf16.mxu0 0
        %381 = vmatpush1.bf16.msra.mxu0 0
        %382 = vmatprep.subr.bf16.mxu0 0
        %383 = vmatpush1.bf16.msra.mxu0 0
        %384 = vmatprep.subr.bf16.mxu0 0
        %385 = vmatpush1.bf16.msra.mxu0 0
        %386 = vmatprep.subr.bf16.mxu0 0
        %387 = vmatpush1.bf16.msra.mxu0 0
        %388 = vmatprep.subr.bf16.mxu0 0
        %389 = vmatpush1.bf16.msra.mxu0 0
        %390 = vmatprep.subr.bf16.mxu0 0
        %391 = vmatpush1.bf16.msra.mxu0 0
        %392 = vmatprep.subr.bf16.mxu0 0
        %393 = vmatpush1.bf16.msra.mxu0 0
        %394 = vmatprep.subr.bf16.mxu0 0
        %395 = vmatpush1.bf16.msra.mxu0 0
        %396 = vmatprep.mubr.bf16.mxu0 0
        %397 = vmatmul.mubr.bf16.gmra.mrb[0].mxu0 %v317
        %v398 = vpop.f32.mrb[0].mxu0
        %v399 = vadd.f32 %v301, %v398
        %v400 = vpop.f32.mrb[0].mxu0
        %v401 = vpop.f32.mrb[0].mxu0
        %v402 = vadd.f32 %v301, %v401
        %v403 = vpop.f32.mrb[0].mxu0
        %404 = vmatprep.mubr.bf16.mxu0 0
        %405 = vmatmul.mubr.bf16.gmra.mrb[0].mxu0 %v320
        %v406 = vpop.f32.mrb[0].mxu0
        %v407 = vadd.f32 %v301, %v406
        %v408 = vpop.f32.mrb[0].mxu0
        %v409 = vpop.f32.mrb[0].mxu0
        %v410 = vadd.f32 %v301, %v409
        %v411 = vpop.f32.mrb[0].mxu0
        %412 = vmatprep.mubr.bf16.mxu0 0
        %413 = vmatmul.mubr.bf16.gmra.mrb[0].mxu0 %v323
        %v414 = vpop.f32.mrb[0].mxu0
        %v415 = vadd.f32 %v301, %v414
        %v416 = vpop.f32.mrb[0].mxu0
        %v417 = vpop.f32.mrb[0].mxu0
        %v418 = vadd.f32 %v301, %v417
        %v419 = vpop.f32.mrb[0].mxu0
        %420 = vmatprep.mubr.bf16.mxu0 0
        %421 = vmatmul.mubr.bf16.gmra.mrb[0].mxu0 %v326
        %v422 = vpop.f32.mrb[0].mxu0
        %v423 = vadd.f32 %v301, %v422
        %v424 = vpop.f32.mrb[0].mxu0
        %v425 = vpop.f32.mrb[0].mxu0
        %v426 = vadd.f32 %v301, %v425
        %v427 = vpop.f32.mrb[0].mxu0
        %428 = vmatprep.mubr.bf16.mxu0 0
        %429 = vmatmul.mubr.bf16.gmra.mrb[0].mxu0 %v329
        %v430 = vpop.f32.mrb[0].mxu0
        %v431 = vadd.f32 %v301, %v430
        %v432 = vpop.f32.mrb[0].mxu0
        %v433 = vpop.f32.mrb[0].mxu0
        %v434 = vadd.f32 %v301, %v433
        %v435 = vpop.f32.mrb[0].mxu0
        %436 = vmatprep.mubr.bf16.mxu0 0
        %437 = vmatmul.mubr.bf16.gmra.mrb[0].mxu0 %v332
        %v438 = vpop.f32.mrb[0].mxu0
        %v439 = vadd.f32 %v301, %v438
        %v440 = vpop.f32.mrb[0].mxu0
        %v441 = vpop.f32.mrb[0].mxu0
        %v442 = vadd.f32 %v301, %v441
        %v443 = vpop.f32.mrb[0].mxu0
        %444 = vmatprep.mubr.bf16.mxu0 0
        %445 = vmatmul.mubr.bf16.gmra.mrb[0].mxu0 %v335
        %v446 = vpop.f32.mrb[0].mxu0
        %v447 = vadd.f32 %v301, %v446
        %v448 = vpop.f32.mrb[0].mxu0
        %v449 = vpop.f32.mrb[0].mxu0
        %v450 = vadd.f32 %v301, %v449
        %v451 = vpop.f32.mrb[0].mxu0
        %452 = vmatprep.mubr.bf16.mxu0 0
        %453 = vmatmul.mubr.bf16.gmra.mrb[0].mxu0 %v338
        %v454 = vpop.f32.mrb[0].mxu0
        %v455 = vadd.f32 %v301, %v454
        %v456 = vpop.f32.mrb[0].mxu0
        %v457 = vpop.f32.mrb[0].mxu0
        %v458 = vadd.f32 %v301, %v457
        %v459 = vpop.f32.mrb[0].mxu0
        %460 = vmatprep.mubr.bf16.mxu0 0
        %461 = vmatmul.mubr.bf16.gmra.mrb[0].mxu0 %v341
        %v462 = vpop.f32.mrb[0].mxu0
        %v463 = vadd.f32 %v301, %v462
        %v464 = vpop.f32.mrb[0].mxu0
        %v465 = vpop.f32.mrb[0].mxu0
        %v466 = vadd.f32 %v301, %v465
        %v467 = vpop.f32.mrb[0].mxu0
        %468 = vmatprep.mubr.bf16.mxu0 0
        %469 = vmatmul.mubr.bf16.gmra.mrb[0].mxu0 %v344
        %v470 = vpop.f32.mrb[0].mxu0
        %v471 = vadd.f32 %v301, %v470
        %v472 = vpop.f32.mrb[0].mxu0
        %v473 = vpop.f32.mrb[0].mxu0
        %v474 = vadd.f32 %v301, %v473
        %v475 = vpop.f32.mrb[0].mxu0
        %476 = vmatprep.mubr.bf16.mxu0 0
        %477 = vmatmul.mubr.bf16.gmra.mrb[0].mxu0 %v347
        %v478 = vpop.f32.mrb[0].mxu0
        %v479 = vadd.f32 %v301, %v478
        %v480 = vpop.f32.mrb[0].mxu0
        %v481 = vpop.f32.mrb[0].mxu0
        %v482 = vadd.f32 %v301, %v481
        %v483 = vpop.f32.mrb[0].mxu0
        %484 = vmatprep.mubr.bf16.mxu0 0
        %485 = vmatmul.mubr.bf16.gmra.mrb[0].mxu0 %v350
        %v486 = vpop.f32.mrb[0].mxu0
        %v487 = vadd.f32 %v301, %v486
        %v488 = vpop.f32.mrb[0].mxu0
        %v489 = vpop.f32.mrb[0].mxu0
        %v490 = vadd.f32 %v301, %v489
        %v491 = vpop.f32.mrb[0].mxu0
        %492 = vmatprep.mubr.bf16.mxu0 0
        %493 = vmatmul.mubr.bf16.gmra.mrb[0].mxu0 %v353
        %v494 = vpop.f32.mrb[0].mxu0
        %v495 = vadd.f32 %v301, %v494
        %v496 = vpop.f32.mrb[0].mxu0
        %v497 = vpop.f32.mrb[0].mxu0
        %v498 = vadd.f32 %v301, %v497
        %v499 = vpop.f32.mrb[0].mxu0
        %500 = vmatprep.mubr.bf16.mxu0 0
        %501 = vmatmul.mubr.bf16.gmra.mrb[0].mxu0 %v356
        %v502 = vpop.f32.mrb[0].mxu0
        %v503 = vadd.f32 %v301, %v502
        %v504 = vpop.f32.mrb[0].mxu0
        %v505 = vpop.f32.mrb[0].mxu0
        %v506 = vadd.f32 %v301, %v505
        %v507 = vpop.f32.mrb[0].mxu0
        %508 = vmatprep.mubr.bf16.mxu0 0
        %509 = vmatmul.mubr.bf16.gmra.mrb[0].mxu0 %v359
        %v510 = vpop.f32.mrb[0].mxu0
        %v511 = vadd.f32 %v301, %v510
        %v512 = vpop.f32.mrb[0].mxu0
        %v513 = vpop.f32.mrb[0].mxu0
        %v514 = vadd.f32 %v301, %v513
        %v515 = vpop.f32.mrb[0].mxu0
        %516 = vmatprep.mubr.bf16.mxu0 0
        %517 = vmatmul.mubr.bf16.gmra.mrb[0].mxu0 %v362
        %v518 = vpop.f32.mrb[0].mxu0
        %v519 = vadd.f32 %v301, %v518
        %v520 = vpop.f32.mrb[0].mxu0
        %v521 = vpop.f32.mrb[0].mxu0
        %v522 = vadd.f32 %v301, %v521
        %v523 = vpop.f32.mrb[0].mxu0
        %524 = vdwg.mxu0
        %v525 = vmax.f32 %v399, 0.0
        %v526 = vmax.f32 %v402, 0.0
        %v527 = vmax.f32 %v407, 0.0
        %v528 = vmax.f32 %v410, 0.0
        %v529 = vmax.f32 %v415, 0.0
        %v530 = vmax.f32 %v418, 0.0
        %v531 = vmax.f32 %v423, 0.0
        %v532 = vmax.f32 %v426, 0.0
        %v533 = vmax.f32 %v431, 0.0
        %v534 = vmax.f32 %v434, 0.0
        %v535 = vmax.f32 %v439, 0.0
        %v536 = vmax.f32 %v442, 0.0
        %v537 = vmax.f32 %v447, 0.0
        %v538 = vmax.f32 %v450, 0.0
        %v539 = vmax.f32 %v455, 0.0
        %v540 = vmax.f32 %v458, 0.0
        %v541 = vmax.f32 %v463, 0.0
        %v542 = vmax.f32 %v466, 0.0
        %v543 = vmax.f32 %v471, 0.0
        %v544 = vmax.f32 %v474, 0.0
        %v545 = vmax.f32 %v479, 0.0
        %v546 = vmax.f32 %v482, 0.0
        %v547 = vmax.f32 %v487, 0.0
        %v548 = vmax.f32 %v490, 0.0
        %v549 = vmax.f32 %v495, 0.0
        %v550 = vmax.f32 %v498, 0.0
        %v551 = vmax.f32 %v503, 0.0
        %v552 = vmax.f32 %v506, 0.0
        %v553 = vmax.f32 %v511, 0.0
        %v554 = vmax.f32 %v514, 0.0
        %v555 = vmax.f32 %v519, 0.0
        %v556 = vmax.f32 %v522, 0.0
        %vm557 = vcmask 31744
        %558 = vst.msk [vmem:[#allocation2] sm:$0xff] %vm557, 0.0
        %559 = vst.msk [vmem:[#allocation2 + $0x8] sm:$0xff] %vm557, 0.0
        %vm560 = vcmask 25600
        %561 = vst.msk [vmem:[#allocation2 + $0x10] sm:$0x3] %vm560, 0.0
        %562 = vst.msk [vmem:[#allocation2 + $0x18] sm:$0xff] %vm557, 0.0
        %563 = vst.msk [vmem:[#allocation2 + $0x20] sm:$0xff] %vm557, 0.0
        %564 = vst.msk [vmem:[#allocation2 + $0x28] sm:$0x3] %vm560, 0.0
        %565 = vst.msk [vmem:[#allocation2 + $0x30] sm:$0xff] %vm557, 0.0
        %566 = vst.msk [vmem:[#allocation2 + $0x38] sm:$0xff] %vm557, 0.0
        %567 = vst.msk [vmem:[#allocation2 + $0x40] sm:$0x3] %vm560, 0.0
        %568 = vst.msk [vmem:[#allocation2 + $0x48] sm:$0xff] %vm557, 0.0
        %569 = vst.msk [vmem:[#allocation2 + $0x50] sm:$0xff] %vm557, 0.0
        %570 = vst.msk [vmem:[#allocation2 + $0x58] sm:$0x3] %vm560, 0.0
        %571 = vst.msk [vmem:[#allocation2 + $0x60] sm:$0xff] %vm557, 0.0
        %572 = vst.msk [vmem:[#allocation2 + $0x68] sm:$0xff] %vm557, 0.0
        %573 = vst.msk [vmem:[#allocation2 + $0x70] sm:$0x3] %vm560, 0.0
        %574 = vst.msk [vmem:[#allocation2 + $0x78] sm:$0xff] %vm557, 0.0
        %575 = vst.msk [vmem:[#allocation2 + $0x80] sm:$0xff] %vm557, 0.0
        %576 = vst.msk [vmem:[#allocation2 + $0x88] sm:$0x3] %vm560, 0.0
        %577 = vst.msk [vmem:[#allocation2 + $0x90] sm:$0xff] %vm557, 0.0
        %578 = vst.msk [vmem:[#allocation2 + $0x98] sm:$0xff] %vm557, 0.0
        %579 = vst.msk [vmem:[#allocation2 + $0xa0] sm:$0x3] %vm560, 0.0
        %580 = vst.msk [vmem:[#allocation2 + $0xa8] sm:$0xff] %vm557, 0.0
        %581 = vst.msk [vmem:[#allocation2 + $0xb0] sm:$0xff] %vm557, 0.0
        %582 = vst.msk [vmem:[#allocation2 + $0xb8] sm:$0x3] %vm560, 0.0
        %583 = vst.msk [vmem:[#allocation2 + $0xc0] sm:$0xff] %vm557, 0.0
        %584 = vst.msk [vmem:[#allocation2 + $0xc8] sm:$0xff] %vm557, 0.0
        %585 = vst.msk [vmem:[#allocation2 + $0xd0] sm:$0x3] %vm560, 0.0
        %586 = vst.msk [vmem:[#allocation2 + $0xd8] sm:$0xff] %vm557, 0.0
        %587 = vst.msk [vmem:[#allocation2 + $0xe0] sm:$0xff] %vm557, 0.0
        %588 = vst.msk [vmem:[#allocation2 + $0xe8] sm:$0x3] %vm560, 0.0
        %589 = vst.msk [vmem:[#allocation2 + $0xf0] sm:$0xff] %vm557, 0.0
        %590 = vst.msk [vmem:[#allocation2 + $0xf8] sm:$0xff] %vm557, 0.0
        %591 = vst.msk [vmem:[#allocation2 + $0x100] sm:$0x3] %vm560, 0.0
        %592 = vst.msk [vmem:[#allocation2 + $0x108] sm:$0xff] %vm557, 0.0
        %593 = vst.msk [vmem:[#allocation2 + $0x110] sm:$0xff] %vm557, 0.0
        %594 = vst.msk [vmem:[#allocation2 + $0x118] sm:$0x3] %vm560, 0.0
        %595 = vst.msk [vmem:[#allocation2 + $0x120] sm:$0xff] %vm557, 0.0
        %596 = vst.msk [vmem:[#allocation2 + $0x128] sm:$0xff] %vm557, 0.0
        %597 = vst.msk [vmem:[#allocation2 + $0x130] sm:$0x3] %vm560, 0.0
        %598 = vst.msk [vmem:[#allocation2 + $0x138] sm:$0xff] %vm557, 0.0
        %599 = vst.msk [vmem:[#allocation2 + $0x140] sm:$0xff] %vm557, 0.0
        %600 = vst.msk [vmem:[#allocation2 + $0x148] sm:$0x3] %vm560, 0.0
        %601 = vst.msk [vmem:[#allocation2 + $0x150] sm:$0xff] %vm557, 0.0
        %602 = vst.msk [vmem:[#allocation2 + $0x158] sm:$0xff] %vm557, 0.0
        %603 = vst.msk [vmem:[#allocation2 + $0x160] sm:$0x3] %vm560, 0.0
        %604 = vst.msk [vmem:[#allocation2 + $0x168] sm:$0xff] %vm557, 0.0
        %605 = vst.msk [vmem:[#allocation2 + $0x170] sm:$0xff] %vm557, 0.0
        %606 = vst.msk [vmem:[#allocation2 + $0x178] sm:$0x3] %vm560, 0.0
        %607 = vst.msk [vmem:[#allocation2 + $0x180] sm:$0xff] %vm557, 0.0
        %608 = vst.msk [vmem:[#allocation2 + $0x188] sm:$0xff] %vm557, 0.0
        %609 = vst.msk [vmem:[#allocation2 + $0x190] sm:$0x3] %vm560, 0.0
        %610 = vst.msk [vmem:[#allocation2 + $0x198] sm:$0xff] %vm557, 0.0
        %611 = vst.msk [vmem:[#allocation2 + $0x1a0] sm:$0xff] %vm557, 0.0
        %612 = vst.msk [vmem:[#allocation2 + $0x1a8] sm:$0x3] %vm560, 0.0
        %s613 = scalar_lea.vmem [#allocation2], 24
        %614 = vst.msk [vmem:[%s613 + $0x1] sm:$0xff] %vm557, %v525
        %615 = vst.msk [vmem:[%s613 + $0x9] sm:$0xff] %vm557, %v526
        %616 = vst.msk [vmem:[%s613 + $0x19] sm:$0xff] %vm557, %v527
        %617 = vst.msk [vmem:[%s613 + $0x21] sm:$0xff] %vm557, %v528
        %618 = vst.msk [vmem:[%s613 + $0x31] sm:$0xff] %vm557, %v529
        %619 = vst.msk [vmem:[%s613 + $0x39] sm:$0xff] %vm557, %v530
        %620 = vst.msk [vmem:[%s613 + $0x49] sm:$0xff] %vm557, %v531
        %621 = vst.msk [vmem:[%s613 + $0x51] sm:$0xff] %vm557, %v532
        %622 = vst.msk [vmem:[%s613 + $0x61] sm:$0xff] %vm557, %v533
        %623 = vst.msk [vmem:[%s613 + $0x69] sm:$0xff] %vm557, %v534
        %624 = vst.msk [vmem:[%s613 + $0x79] sm:$0xff] %vm557, %v535
        %625 = vst.msk [vmem:[%s613 + $0x81] sm:$0xff] %vm557, %v536
        %626 = vst.msk [vmem:[%s613 + $0x91] sm:$0xff] %vm557, %v537
        %627 = vst.msk [vmem:[%s613 + $0x99] sm:$0xff] %vm557, %v538
        %628 = vst.msk [vmem:[%s613 + $0xa9] sm:$0xff] %vm557, %v539
        %629 = vst.msk [vmem:[%s613 + $0xb1] sm:$0xff] %vm557, %v540
        %630 = vst.msk [vmem:[%s613 + $0xc1] sm:$0xff] %vm557, %v541
        %631 = vst.msk [vmem:[%s613 + $0xc9] sm:$0xff] %vm557, %v542
        %632 = vst.msk [vmem:[%s613 + $0xd9] sm:$0xff] %vm557, %v543
        %633 = vst.msk [vmem:[%s613 + $0xe1] sm:$0xff] %vm557, %v544
        %634 = vst.msk [vmem:[%s613 + $0xf1] sm:$0xff] %vm557, %v545
        %635 = vst.msk [vmem:[%s613 + $0xf9] sm:$0xff] %vm557, %v546
        %636 = vst.msk [vmem:[%s613 + $0x109] sm:$0xff] %vm557, %v547
        %637 = vst.msk [vmem:[%s613 + $0x111] sm:$0xff] %vm557, %v548
        %638 = vst.msk [vmem:[%s613 + $0x121] sm:$0xff] %vm557, %v549
        %639 = vst.msk [vmem:[%s613 + $0x129] sm:$0xff] %vm557, %v550
        %640 = vst.msk [vmem:[%s613 + $0x139] sm:$0xff] %vm557, %v551
        %641 = vst.msk [vmem:[%s613 + $0x141] sm:$0xff] %vm557, %v552
        %642 = vst.msk [vmem:[%s613 + $0x151] sm:$0xff] %vm557, %v553
        %643 = vst.msk [vmem:[%s613 + $0x159] sm:$0xff] %vm557, %v554
        %644 = vst.msk [vmem:[%s613 + $0x169] sm:$0xff] %vm557, %v555
        %645 = vst.msk [vmem:[%s613 + $0x171] sm:$0xff] %vm557, %v556
        %v646 = vld [vmem:[#allocation2] sm:$0xff]
        %v647 = vld [vmem:[#allocation2 + $0x8] sm:$0xff]
        %v648 = vld [vmem:[#allocation2 + $0x18] sm:$0xff]
        %v649 = vld [vmem:[#allocation2 + $0x20] sm:$0xff]
        %v650 = vld [vmem:[#allocation2 + $0x30] sm:$0xff]
        %v651 = vld [vmem:[#allocation2 + $0x38] sm:$0xff]
        %v652 = vld [vmem:[#allocation2 + $0x48] sm:$0xff]
        %v653 = vld [vmem:[#allocation2 + $0x50] sm:$0xff]
        %v654 = vld [vmem:[#allocation2 + $0x60] sm:$0xff]
        %v655 = vld [vmem:[#allocation2 + $0x68] sm:$0xff]
        %v656 = vld [vmem:[#allocation2 + $0x78] sm:$0xff]
        %v657 = vld [vmem:[#allocation2 + $0x80] sm:$0xff]
        %v658 = vld [vmem:[#allocation2 + $0x90] sm:$0xff]
        %v659 = vld [vmem:[#allocation2 + $0x98] sm:$0xff]
        %v660 = vld [vmem:[#allocation2 + $0xa8] sm:$0xff]
        %v661 = vld [vmem:[#allocation2 + $0xb0] sm:$0xff]
        %v662 = vld [vmem:[#allocation2 + $0xc0] sm:$0xff]
        %v663 = vld [vmem:[#allocation2 + $0xc8] sm:$0xff]
        %v664 = vld [vmem:[#allocation2 + $0xd8] sm:$0xff]
        %v665 = vld [vmem:[#allocation2 + $0xe0] sm:$0xff]
        %v666 = vld [vmem:[#allocation2 + $0xf0] sm:$0xff]
        %v667 = vld [vmem:[#allocation2 + $0xf8] sm:$0xff]
        %v668 = vld [vmem:[#allocation2 + $0x108] sm:$0xff]
        %v669 = vld [vmem:[#allocation2 + $0x110] sm:$0xff]
        %v670 = vld [vmem:[#allocation2 + $0x120] sm:$0xff]
        %v671 = vld [vmem:[#allocation2 + $0x128] sm:$0xff]
        %v672 = vld [vmem:[#allocation2 + $0x138] sm:$0xff]
        %v673 = vld [vmem:[#allocation2 + $0x140] sm:$0xff]
        %v674 = vld [vmem:[#allocation2 + $0x150] sm:$0xff]
        %v675 = vld [vmem:[#allocation2 + $0x158] sm:$0xff]
        %v676 = vld [vmem:[#allocation2 + $0x168] sm:$0xff]
        %v677 = vld [vmem:[#allocation2 + $0x170] sm:$0xff]
        %v678 = vld [vmem:[#allocation2 + $0x1] sm:$0xff]
        %v679 = vld [vmem:[#allocation2 + $0x9] sm:$0xff]
        %v680 = vld [vmem:[#allocation2 + $0x19] sm:$0xff]
        %v681 = vld [vmem:[#allocation2 + $0x21] sm:$0xff]
        %v682 = vld [vmem:[#allocation2 + $0x31] sm:$0xff]
        %v683 = vld [vmem:[#allocation2 + $0x39] sm:$0xff]
        %v684 = vld [vmem:[#allocation2 + $0x49] sm:$0xff]
        %v685 = vld [vmem:[#allocation2 + $0x51] sm:$0xff]
        %v686 = vld [vmem:[#allocation2 + $0x61] sm:$0xff]
        %v687 = vld [vmem:[#allocation2 + $0x69] sm:$0xff]
        %v688 = vld [vmem:[#allocation2 + $0x79] sm:$0xff]
        %v689 = vld [vmem:[#allocation2 + $0x81] sm:$0xff]
        %v690 = vld [vmem:[#allocation2 + $0x91] sm:$0xff]
        %v691 = vld [vmem:[#allocation2 + $0x99] sm:$0xff]
        %v692 = vld [vmem:[#allocation2 + $0xa9] sm:$0xff]
        %v693 = vld [vmem:[#allocation2 + $0xb1] sm:$0xff]
        %v694 = vld [vmem:[#allocation2 + $0xc1] sm:$0xff]
        %v695 = vld [vmem:[#allocation2 + $0xc9] sm:$0xff]
        %v696 = vld [vmem:[#allocation2 + $0xd9] sm:$0xff]
        %v697 = vld [vmem:[#allocation2 + $0xe1] sm:$0xff]
        %v698 = vld [vmem:[#allocation2 + $0xf1] sm:$0xff]
        %v699 = vld [vmem:[#allocation2 + $0xf9] sm:$0xff]
        %v700 = vld [vmem:[#allocation2 + $0x109] sm:$0xff]
        %v701 = vld [vmem:[#allocation2 + $0x111] sm:$0xff]
        %v702 = vld [vmem:[#allocation2 + $0x121] sm:$0xff]
        %v703 = vld [vmem:[#allocation2 + $0x129] sm:$0xff]
        %v704 = vld [vmem:[#allocation2 + $0x139] sm:$0xff]
        %v705 = vld [vmem:[#allocation2 + $0x141] sm:$0xff]
        %v706 = vld [vmem:[#allocation2 + $0x151] sm:$0xff]
        %v707 = vld [vmem:[#allocation2 + $0x159] sm:$0xff]
        %v708 = vld [vmem:[#allocation2 + $0x169] sm:$0xff]
        %v709 = vld [vmem:[#allocation2 + $0x171] sm:$0xff]
        %v710 = vld [vmem:[#allocation2 + $0x2] sm:$0xff]
        %v711 = vld [vmem:[#allocation2 + $0xa] sm:$0xff]
        %v712 = vld [vmem:[#allocation2 + $0x1a] sm:$0xff]
        %v713 = vld [vmem:[#allocation2 + $0x22] sm:$0xff]
        %v714 = vld [vmem:[#allocation2 + $0x32] sm:$0xff]
        %v715 = vld [vmem:[#allocation2 + $0x3a] sm:$0xff]
        %v716 = vld [vmem:[#allocation2 + $0x4a] sm:$0xff]
        %v717 = vld [vmem:[#allocation2 + $0x52] sm:$0xff]
        %v718 = vld [vmem:[#allocation2 + $0x62] sm:$0xff]
        %v719 = vld [vmem:[#allocation2 + $0x6a] sm:$0xff]
        %v720 = vld [vmem:[#allocation2 + $0x7a] sm:$0xff]
        %v721 = vld [vmem:[#allocation2 + $0x82] sm:$0xff]
        %v722 = vld [vmem:[#allocation2 + $0x92] sm:$0xff]
        %v723 = vld [vmem:[#allocation2 + $0x9a] sm:$0xff]
        %v724 = vld [vmem:[#allocation2 + $0xaa] sm:$0xff]
        %v725 = vld [vmem:[#allocation2 + $0xb2] sm:$0xff]
        %v726 = vld [vmem:[#allocation2 + $0xc2] sm:$0xff]
        %v727 = vld [vmem:[#allocation2 + $0xca] sm:$0xff]
        %v728 = vld [vmem:[#allocation2 + $0xda] sm:$0xff]
        %v729 = vld [vmem:[#allocation2 + $0xe2] sm:$0xff]
        %v730 = vld [vmem:[#allocation2 + $0xf2] sm:$0xff]
        %v731 = vld [vmem:[#allocation2 + $0xfa] sm:$0xff]
        %v732 = vld [vmem:[#allocation2 + $0x10a] sm:$0xff]
        %v733 = vld [vmem:[#allocation2 + $0x112] sm:$0xff]
        %v734 = vld [vmem:[#allocation2 + $0x122] sm:$0xff]
        %v735 = vld [vmem:[#allocation2 + $0x12a] sm:$0xff]
        %v736 = vld [vmem:[#allocation2 + $0x13a] sm:$0xff]
        %v737 = vld [vmem:[#allocation2 + $0x142] sm:$0xff]
        %v738 = vld [vmem:[#allocation2 + $0x152] sm:$0xff]
        %v739 = vld [vmem:[#allocation2 + $0x15a] sm:$0xff]
        %v740 = vld [vmem:[#allocation2 + $0x16a] sm:$0xff]
        %v741 = vld [vmem:[#allocation2 + $0x172] sm:$0xff]
        %v742 = vld [vmem:[%s613] sm:$0xff]
        %v743 = vld [vmem:[%s613 + $0x8] sm:$0xff]
        %v744 = vld [vmem:[%s613 + $0x18] sm:$0xff]
        %v745 = vld [vmem:[%s613 + $0x20] sm:$0xff]
        %v746 = vld [vmem:[%s613 + $0x30] sm:$0xff]
        %v747 = vld [vmem:[%s613 + $0x38] sm:$0xff]
        %v748 = vld [vmem:[%s613 + $0x48] sm:$0xff]
        %v749 = vld [vmem:[%s613 + $0x50] sm:$0xff]
        %v750 = vld [vmem:[%s613 + $0x60] sm:$0xff]
        %v751 = vld [vmem:[%s613 + $0x68] sm:$0xff]
        %v752 = vld [vmem:[%s613 + $0x78] sm:$0xff]
        %v753 = vld [vmem:[%s613 + $0x80] sm:$0xff]
        %v754 = vld [vmem:[%s613 + $0x90] sm:$0xff]
        %v755 = vld [vmem:[%s613 + $0x98] sm:$0xff]
        %v756 = vld [vmem:[%s613 + $0xa8] sm:$0xff]
        %v757 = vld [vmem:[%s613 + $0xb0] sm:$0xff]
        %v758 = vld [vmem:[%s613 + $0xc0] sm:$0xff]
        %v759 = vld [vmem:[%s613 + $0xc8] sm:$0xff]
        %v760 = vld [vmem:[%s613 + $0xd8] sm:$0xff]
        %v761 = vld [vmem:[%s613 + $0xe0] sm:$0xff]
        %v762 = vld [vmem:[%s613 + $0xf0] sm:$0xff]
        %v763 = vld [vmem:[%s613 + $0xf8] sm:$0xff]
        %v764 = vld [vmem:[%s613 + $0x108] sm:$0xff]
        %v765 = vld [vmem:[%s613 + $0x110] sm:$0xff]
        %v766 = vld [vmem:[%s613 + $0x120] sm:$0xff]
        %v767 = vld [vmem:[%s613 + $0x128] sm:$0xff]
        %v768 = vld [vmem:[%s613 + $0x138] sm:$0xff]
        %v769 = vld [vmem:[%s613 + $0x140] sm:$0xff]
        %v770 = vld [vmem:[%s613 + $0x150] sm:$0xff]
        %v771 = vld [vmem:[%s613 + $0x158] sm:$0xff]
        %v772 = vld [vmem:[%s613 + $0x168] sm:$0xff]
        %v773 = vld [vmem:[%s613 + $0x170] sm:$0xff]
        %v774 = vld [vmem:[%s613 + $0x1] sm:$0xff]
        %v775 = vld [vmem:[%s613 + $0x9] sm:$0xff]
        %v776 = vld [vmem:[%s613 + $0x19] sm:$0xff]
        %v777 = vld [vmem:[%s613 + $0x21] sm:$0xff]
        %v778 = vld [vmem:[%s613 + $0x31] sm:$0xff]
        %v779 = vld [vmem:[%s613 + $0x39] sm:$0xff]
        %v780 = vld [vmem:[%s613 + $0x49] sm:$0xff]
        %v781 = vld [vmem:[%s613 + $0x51] sm:$0xff]
        %v782 = vld [vmem:[%s613 + $0x61] sm:$0xff]
        %v783 = vld [vmem:[%s613 + $0x69] sm:$0xff]
        %v784 = vld [vmem:[%s613 + $0x79] sm:$0xff]
        %v785 = vld [vmem:[%s613 + $0x81] sm:$0xff]
        %v786 = vld [vmem:[%s613 + $0x91] sm:$0xff]
        %v787 = vld [vmem:[%s613 + $0x99] sm:$0xff]
        %v788 = vld [vmem:[%s613 + $0xa9] sm:$0xff]
        %v789 = vld [vmem:[%s613 + $0xb1] sm:$0xff]
        %v790 = vld [vmem:[%s613 + $0xc1] sm:$0xff]
        %v791 = vld [vmem:[%s613 + $0xc9] sm:$0xff]
        %v792 = vld [vmem:[%s613 + $0xd9] sm:$0xff]
        %v793 = vld [vmem:[%s613 + $0xe1] sm:$0xff]
        %v794 = vld [vmem:[%s613 + $0xf1] sm:$0xff]
        %v795 = vld [vmem:[%s613 + $0xf9] sm:$0xff]
        %v796 = vld [vmem:[%s613 + $0x109] sm:$0xff]
        %v797 = vld [vmem:[%s613 + $0x111] sm:$0xff]
        %v798 = vld [vmem:[%s613 + $0x121] sm:$0xff]
        %v799 = vld [vmem:[%s613 + $0x129] sm:$0xff]
        %v800 = vld [vmem:[%s613 + $0x139] sm:$0xff]
        %v801 = vld [vmem:[%s613 + $0x141] sm:$0xff]
        %v802 = vld [vmem:[%s613 + $0x151] sm:$0xff]
        %v803 = vld [vmem:[%s613 + $0x159] sm:$0xff]
        %v804 = vld [vmem:[%s613 + $0x169] sm:$0xff]
        %v805 = vld [vmem:[%s613 + $0x171] sm:$0xff]
        %v806 = vld [vmem:[%s613 + $0x2] sm:$0xff]
        %v807 = vld [vmem:[%s613 + $0xa] sm:$0xff]
        %v808 = vld [vmem:[%s613 + $0x1a] sm:$0xff]
        %v809 = vld [vmem:[%s613 + $0x22] sm:$0xff]
        %v810 = vld [vmem:[%s613 + $0x32] sm:$0xff]
        %v811 = vld [vmem:[%s613 + $0x3a] sm:$0xff]
        %v812 = vld [vmem:[%s613 + $0x4a] sm:$0xff]
        %v813 = vld [vmem:[%s613 + $0x52] sm:$0xff]
        %v814 = vld [vmem:[%s613 + $0x62] sm:$0xff]
        %v815 = vld [vmem:[%s613 + $0x6a] sm:$0xff]
        %v816 = vld [vmem:[%s613 + $0x7a] sm:$0xff]
        %v817 = vld [vmem:[%s613 + $0x82] sm:$0xff]
        %v818 = vld [vmem:[%s613 + $0x92] sm:$0xff]
        %v819 = vld [vmem:[%s613 + $0x9a] sm:$0xff]
        %v820 = vld [vmem:[%s613 + $0xaa] sm:$0xff]
        %v821 = vld [vmem:[%s613 + $0xb2] sm:$0xff]
        %v822 = vld [vmem:[%s613 + $0xc2] sm:$0xff]
        %v823 = vld [vmem:[%s613 + $0xca] sm:$0xff]
        %v824 = vld [vmem:[%s613 + $0xda] sm:$0xff]
        %v825 = vld [vmem:[%s613 + $0xe2] sm:$0xff]
        %v826 = vld [vmem:[%s613 + $0xf2] sm:$0xff]
        %v827 = vld [vmem:[%s613 + $0xfa] sm:$0xff]
        %v828 = vld [vmem:[%s613 + $0x10a] sm:$0xff]
        %v829 = vld [vmem:[%s613 + $0x112] sm:$0xff]
        %v830 = vld [vmem:[%s613 + $0x122] sm:$0xff]
        %v831 = vld [vmem:[%s613 + $0x12a] sm:$0xff]
        %v832 = vld [vmem:[%s613 + $0x13a] sm:$0xff]
        %v833 = vld [vmem:[%s613 + $0x142] sm:$0xff]
        %v834 = vld [vmem:[%s613 + $0x152] sm:$0xff]
        %v835 = vld [vmem:[%s613 + $0x15a] sm:$0xff]
        %v836 = vld [vmem:[%s613 + $0x16a] sm:$0xff]
        %v837 = vld [vmem:[%s613 + $0x172] sm:$0xff]
        %s838 = scalar_lea.vmem [#allocation2], 48
        %v839 = vld [vmem:[%s838] sm:$0xff]
        %v840 = vld [vmem:[%s838 + $0x8] sm:$0xff]
        %v841 = vld [vmem:[%s838 + $0x18] sm:$0xff]
        %v842 = vld [vmem:[%s838 + $0x20] sm:$0xff]
        %v843 = vld [vmem:[%s838 + $0x30] sm:$0xff]
        %v844 = vld [vmem:[%s838 + $0x38] sm:$0xff]
        %v845 = vld [vmem:[%s838 + $0x48] sm:$0xff]
        %v846 = vld [vmem:[%s838 + $0x50] sm:$0xff]
        %v847 = vld [vmem:[%s838 + $0x60] sm:$0xff]
        %v848 = vld [vmem:[%s838 + $0x68] sm:$0xff]
        %v849 = vld [vmem:[%s838 + $0x78] sm:$0xff]
        %v850 = vld [vmem:[%s838 + $0x80] sm:$0xff]
        %v851 = vld [vmem:[%s838 + $0x90] sm:$0xff]
        %v852 = vld [vmem:[%s838 + $0x98] sm:$0xff]
        %v853 = vld [vmem:[%s838 + $0xa8] sm:$0xff]
        %v854 = vld [vmem:[%s838 + $0xb0] sm:$0xff]
        %v855 = vld [vmem:[%s838 + $0xc0] sm:$0xff]
        %v856 = vld [vmem:[%s838 + $0xc8] sm:$0xff]
        %v857 = vld [vmem:[%s838 + $0xd8] sm:$0xff]
        %v858 = vld [vmem:[%s838 + $0xe0] sm:$0xff]
        %v859 = vld [vmem:[%s838 + $0xf0] sm:$0xff]
        %v860 = vld [vmem:[%s838 + $0xf8] sm:$0xff]
        %v861 = vld [vmem:[%s838 + $0x108] sm:$0xff]
        %v862 = vld [vmem:[%s838 + $0x110] sm:$0xff]
        %v863 = vld [vmem:[%s838 + $0x120] sm:$0xff]
        %v864 = vld [vmem:[%s838 + $0x128] sm:$0xff]
        %v865 = vld [vmem:[%s838 + $0x138] sm:$0xff]
        %v866 = vld [vmem:[%s838 + $0x140] sm:$0xff]
        %v867 = vld [vmem:[%s838 + $0x150] sm:$0xff]
        %v868 = vld [vmem:[%s838 + $0x158] sm:$0xff]
        %v869 = vld [vmem:[%s838 + $0x168] sm:$0xff]
        %v870 = vld [vmem:[%s838 + $0x170] sm:$0xff]
        %v871 = vld [vmem:[%s838 + $0x1] sm:$0xff]
        %v872 = vld [vmem:[%s838 + $0x9] sm:$0xff]
        %v873 = vld [vmem:[%s838 + $0x19] sm:$0xff]
        %v874 = vld [vmem:[%s838 + $0x21] sm:$0xff]
        %v875 = vld [vmem:[%s838 + $0x31] sm:$0xff]
        %v876 = vld [vmem:[%s838 + $0x39] sm:$0xff]
        %v877 = vld [vmem:[%s838 + $0x49] sm:$0xff]
        %v878 = vld [vmem:[%s838 + $0x51] sm:$0xff]
        %v879 = vld [vmem:[%s838 + $0x61] sm:$0xff]
        %v880 = vld [vmem:[%s838 + $0x69] sm:$0xff]
        %v881 = vld [vmem:[%s838 + $0x79] sm:$0xff]
        %v882 = vld [vmem:[%s838 + $0x81] sm:$0xff]
        %v883 = vld [vmem:[%s838 + $0x91] sm:$0xff]
        %v884 = vld [vmem:[%s838 + $0x99] sm:$0xff]
        %v885 = vld [vmem:[%s838 + $0xa9] sm:$0xff]
        %v886 = vld [vmem:[%s838 + $0xb1] sm:$0xff]
        %v887 = vld [vmem:[%s838 + $0xc1] sm:$0xff]
        %v888 = vld [vmem:[%s838 + $0xc9] sm:$0xff]
        %v889 = vld [vmem:[%s838 + $0xd9] sm:$0xff]
        %v890 = vld [vmem:[%s838 + $0xe1] sm:$0xff]
        %v891 = vld [vmem:[%s838 + $0xf1] sm:$0xff]
        %v892 = vld [vmem:[%s838 + $0xf9] sm:$0xff]
        %v893 = vld [vmem:[%s838 + $0x109] sm:$0xff]
        %v894 = vld [vmem:[%s838 + $0x111] sm:$0xff]
        %v895 = vld [vmem:[%s838 + $0x121] sm:$0xff]
        %v896 = vld [vmem:[%s838 + $0x129] sm:$0xff]
        %v897 = vld [vmem:[%s838 + $0x139] sm:$0xff]
        %v898 = vld [vmem:[%s838 + $0x141] sm:$0xff]
        %v899 = vld [vmem:[%s838 + $0x151] sm:$0xff]
        %v900 = vld [vmem:[%s838 + $0x159] sm:$0xff]
        %v901 = vld [vmem:[%s838 + $0x169] sm:$0xff]
        %v902 = vld [vmem:[%s838 + $0x171] sm:$0xff]
        %v903 = vld [vmem:[%s838 + $0x2] sm:$0xff]
        %v904 = vld [vmem:[%s838 + $0xa] sm:$0xff]
        %v905 = vld [vmem:[%s838 + $0x1a] sm:$0xff]
        %v906 = vld [vmem:[%s838 + $0x22] sm:$0xff]
        %v907 = vld [vmem:[%s838 + $0x32] sm:$0xff]
        %v908 = vld [vmem:[%s838 + $0x3a] sm:$0xff]
        %v909 = vld [vmem:[%s838 + $0x4a] sm:$0xff]
        %v910 = vld [vmem:[%s838 + $0x52] sm:$0xff]
        %v911 = vld [vmem:[%s838 + $0x62] sm:$0xff]
        %v912 = vld [vmem:[%s838 + $0x6a] sm:$0xff]
        %v913 = vld [vmem:[%s838 + $0x7a] sm:$0xff]
        %v914 = vld [vmem:[%s838 + $0x82] sm:$0xff]
        %v915 = vld [vmem:[%s838 + $0x92] sm:$0xff]
        %v916 = vld [vmem:[%s838 + $0x9a] sm:$0xff]
        %v917 = vld [vmem:[%s838 + $0xaa] sm:$0xff]
        %v918 = vld [vmem:[%s838 + $0xb2] sm:$0xff]
        %v919 = vld [vmem:[%s838 + $0xc2] sm:$0xff]
        %v920 = vld [vmem:[%s838 + $0xca] sm:$0xff]
        %v921 = vld [vmem:[%s838 + $0xda] sm:$0xff]
        %v922 = vld [vmem:[%s838 + $0xe2] sm:$0xff]
        %v923 = vld [vmem:[%s838 + $0xf2] sm:$0xff]
        %v924 = vld [vmem:[%s838 + $0xfa] sm:$0xff]
        %v925 = vld [vmem:[%s838 + $0x10a] sm:$0xff]
        %v926 = vld [vmem:[%s838 + $0x112] sm:$0xff]
        %v927 = vld [vmem:[%s838 + $0x122] sm:$0xff]
        %v928 = vld [vmem:[%s838 + $0x12a] sm:$0xff]
        %v929 = vld [vmem:[%s838 + $0x13a] sm:$0xff]
        %v930 = vld [vmem:[%s838 + $0x142] sm:$0xff]
        %v931 = vld [vmem:[%s838 + $0x152] sm:$0xff]
        %v932 = vld [vmem:[%s838 + $0x15a] sm:$0xff]
        %v933 = vld [vmem:[%s838 + $0x16a] sm:$0xff]
        %v934 = vld [vmem:[%s838 + $0x172] sm:$0xff]
        %967 = vrot.lane.b32.xlu0 %v678, 4
        %v968 = vpop.permute.xlu0 %967
        %969 = vrot.lane.b32.xlu0 %v679, 4
        %v970 = vpop.permute.xlu0 %969
        %971 = vrot.lane.b32.xlu0 %v680, 4
        %v972 = vpop.permute.xlu0 %971
        %973 = vrot.lane.b32.xlu0 %v681, 4
        %v974 = vpop.permute.xlu0 %973
        %975 = vrot.lane.b32.xlu0 %v682, 4
        %v976 = vpop.permute.xlu0 %975
        %977 = vrot.lane.b32.xlu0 %v683, 4
        %v978 = vpop.permute.xlu0 %977
        %979 = vrot.lane.b32.xlu0 %v684, 4
        %v980 = vpop.permute.xlu0 %979
        %981 = vrot.lane.b32.xlu0 %v685, 4
        %v982 = vpop.permute.xlu0 %981
        %983 = vrot.lane.b32.xlu0 %v686, 4
        %v984 = vpop.permute.xlu0 %983
        %985 = vrot.lane.b32.xlu0 %v687, 4
        %v986 = vpop.permute.xlu0 %985
        %987 = vrot.lane.b32.xlu0 %v688, 4
        %v988 = vpop.permute.xlu0 %987
        %989 = vrot.lane.b32.xlu0 %v689, 4
        %v990 = vpop.permute.xlu0 %989
        %991 = vrot.lane.b32.xlu0 %v690, 4
        %v992 = vpop.permute.xlu0 %991
        %993 = vrot.lane.b32.xlu0 %v691, 4
        %v994 = vpop.permute.xlu0 %993
        %995 = vrot.lane.b32.xlu0 %v692, 4
        %v996 = vpop.permute.xlu0 %995
        %997 = vrot.lane.b32.xlu0 %v693, 4
        %v998 = vpop.permute.xlu0 %997
        %999 = vrot.lane.b32.xlu0 %v694, 4
        %v1000 = vpop.permute.xlu0 %999
        %1001 = vrot.lane.b32.xlu0 %v695, 4
        %v1002 = vpop.permute.xlu0 %1001
        %1003 = vrot.lane.b32.xlu0 %v696, 4
        %v1004 = vpop.permute.xlu0 %1003
        %1005 = vrot.lane.b32.xlu0 %v697, 4
        %v1006 = vpop.permute.xlu0 %1005
        %1007 = vrot.lane.b32.xlu0 %v698, 4
        %v1008 = vpop.permute.xlu0 %1007
        %1009 = vrot.lane.b32.xlu0 %v699, 4
        %v1010 = vpop.permute.xlu0 %1009
        %1011 = vrot.lane.b32.xlu0 %v700, 4
        %v1012 = vpop.permute.xlu0 %1011
        %1013 = vrot.lane.b32.xlu0 %v701, 4
        %v1014 = vpop.permute.xlu0 %1013
        %1015 = vrot.lane.b32.xlu0 %v702, 4
        %v1016 = vpop.permute.xlu0 %1015
        %1017 = vrot.lane.b32.xlu0 %v703, 4
        %v1018 = vpop.permute.xlu0 %1017
        %1019 = vrot.lane.b32.xlu0 %v704, 4
        %v1020 = vpop.permute.xlu0 %1019
        %1021 = vrot.lane.b32.xlu0 %v705, 4
        %v1022 = vpop.permute.xlu0 %1021
        %1023 = vrot.lane.b32.xlu0 %v706, 4
        %v1024 = vpop.permute.xlu0 %1023
        %1025 = vrot.lane.b32.xlu0 %v707, 4
        %v1026 = vpop.permute.xlu0 %1025
        %1027 = vrot.lane.b32.xlu0 %v708, 4
        %v1028 = vpop.permute.xlu0 %1027
        %1029 = vrot.lane.b32.xlu0 %v709, 4
        %v1030 = vpop.permute.xlu0 %1029
        %1095 = vrot.lane.b32.xlu0 %v710, 8
        %v1096 = vpop.permute.xlu0 %1095
        %1097 = vrot.lane.b32.xlu0 %v711, 8
        %v1098 = vpop.permute.xlu0 %1097
        %1099 = vrot.lane.b32.xlu0 %v712, 8
        %v1100 = vpop.permute.xlu0 %1099
        %1101 = vrot.lane.b32.xlu0 %v713, 8
        %v1102 = vpop.permute.xlu0 %1101
        %1103 = vrot.lane.b32.xlu0 %v714, 8
        %v1104 = vpop.permute.xlu0 %1103
        %1105 = vrot.lane.b32.xlu0 %v715, 8
        %v1106 = vpop.permute.xlu0 %1105
        %1107 = vrot.lane.b32.xlu0 %v716, 8
        %v1108 = vpop.permute.xlu0 %1107
        %1109 = vrot.lane.b32.xlu0 %v717, 8
        %v1110 = vpop.permute.xlu0 %1109
        %1111 = vrot.lane.b32.xlu0 %v718, 8
        %v1112 = vpop.permute.xlu0 %1111
        %1113 = vrot.lane.b32.xlu0 %v719, 8
        %v1114 = vpop.permute.xlu0 %1113
        %1115 = vrot.lane.b32.xlu0 %v720, 8
        %v1116 = vpop.permute.xlu0 %1115
        %1117 = vrot.lane.b32.xlu0 %v721, 8
        %v1118 = vpop.permute.xlu0 %1117
        %1119 = vrot.lane.b32.xlu0 %v722, 8
        %v1120 = vpop.permute.xlu0 %1119
        %1121 = vrot.lane.b32.xlu0 %v723, 8
        %v1122 = vpop.permute.xlu0 %1121
        %1123 = vrot.lane.b32.xlu0 %v724, 8
        %v1124 = vpop.permute.xlu0 %1123
        %1125 = vrot.lane.b32.xlu0 %v725, 8
        %v1126 = vpop.permute.xlu0 %1125
        %1127 = vrot.lane.b32.xlu0 %v726, 8
        %v1128 = vpop.permute.xlu0 %1127
        %1129 = vrot.lane.b32.xlu0 %v727, 8
        %v1130 = vpop.permute.xlu0 %1129
        %1131 = vrot.lane.b32.xlu0 %v728, 8
        %v1132 = vpop.permute.xlu0 %1131
        %1133 = vrot.lane.b32.xlu0 %v729, 8
        %v1134 = vpop.permute.xlu0 %1133
        %1135 = vrot.lane.b32.xlu0 %v730, 8
        %v1136 = vpop.permute.xlu0 %1135
        %1137 = vrot.lane.b32.xlu0 %v731, 8
        %v1138 = vpop.permute.xlu0 %1137
        %1139 = vrot.lane.b32.xlu0 %v732, 8
        %v1140 = vpop.permute.xlu0 %1139
        %1141 = vrot.lane.b32.xlu0 %v733, 8
        %v1142 = vpop.permute.xlu0 %1141
        %1143 = vrot.lane.b32.xlu0 %v734, 8
        %v1144 = vpop.permute.xlu0 %1143
        %1145 = vrot.lane.b32.xlu0 %v735, 8
        %v1146 = vpop.permute.xlu0 %1145
        %1147 = vrot.lane.b32.xlu0 %v736, 8
        %v1148 = vpop.permute.xlu0 %1147
        %1149 = vrot.lane.b32.xlu0 %v737, 8
        %v1150 = vpop.permute.xlu0 %1149
        %1151 = vrot.lane.b32.xlu0 %v738, 8
        %v1152 = vpop.permute.xlu0 %1151
        %1153 = vrot.lane.b32.xlu0 %v739, 8
        %v1154 = vpop.permute.xlu0 %1153
        %1155 = vrot.lane.b32.xlu0 %v740, 8
        %v1156 = vpop.permute.xlu0 %1155
        %1157 = vrot.lane.b32.xlu0 %v741, 8
        %v1158 = vpop.permute.xlu0 %1157
        %1223 = vrot.lane.b32.xlu0 %v742, 12
        %v1224 = vpop.permute.xlu0 %1223
        %1225 = vrot.lane.b32.xlu0 %v743, 12
        %v1226 = vpop.permute.xlu0 %1225
        %1227 = vrot.lane.b32.xlu0 %v744, 12
        %v1228 = vpop.permute.xlu0 %1227
        %1229 = vrot.lane.b32.xlu0 %v745, 12
        %v1230 = vpop.permute.xlu0 %1229
        %1231 = vrot.lane.b32.xlu0 %v746, 12
        %v1232 = vpop.permute.xlu0 %1231
        %1233 = vrot.lane.b32.xlu0 %v747, 12
        %v1234 = vpop.permute.xlu0 %1233
        %1235 = vrot.lane.b32.xlu0 %v748, 12
        %v1236 = vpop.permute.xlu0 %1235
        %1237 = vrot.lane.b32.xlu0 %v749, 12
        %v1238 = vpop.permute.xlu0 %1237
        %1239 = vrot.lane.b32.xlu0 %v750, 12
        %v1240 = vpop.permute.xlu0 %1239
        %1241 = vrot.lane.b32.xlu0 %v751, 12
        %v1242 = vpop.permute.xlu0 %1241
        %1243 = vrot.lane.b32.xlu0 %v752, 12
        %v1244 = vpop.permute.xlu0 %1243
        %1245 = vrot.lane.b32.xlu0 %v753, 12
        %v1246 = vpop.permute.xlu0 %1245
        %1247 = vrot.lane.b32.xlu0 %v754, 12
        %v1248 = vpop.permute.xlu0 %1247
        %1249 = vrot.lane.b32.xlu0 %v755, 12
        %v1250 = vpop.permute.xlu0 %1249
        %1251 = vrot.lane.b32.xlu0 %v756, 12
        %v1252 = vpop.permute.xlu0 %1251
        %1253 = vrot.lane.b32.xlu0 %v757, 12
        %v1254 = vpop.permute.xlu0 %1253
        %1255 = vrot.lane.b32.xlu0 %v758, 12
        %v1256 = vpop.permute.xlu0 %1255
        %1257 = vrot.lane.b32.xlu0 %v759, 12
        %v1258 = vpop.permute.xlu0 %1257
        %1259 = vrot.lane.b32.xlu0 %v760, 12
        %v1260 = vpop.permute.xlu0 %1259
        %1261 = vrot.lane.b32.xlu0 %v761, 12
        %v1262 = vpop.permute.xlu0 %1261
        %1263 = vrot.lane.b32.xlu0 %v762, 12
        %v1264 = vpop.permute.xlu0 %1263
        %1265 = vrot.lane.b32.xlu0 %v763, 12
        %v1266 = vpop.permute.xlu0 %1265
        %1267 = vrot.lane.b32.xlu0 %v764, 12
        %v1268 = vpop.permute.xlu0 %1267
        %1269 = vrot.lane.b32.xlu0 %v765, 12
        %v1270 = vpop.permute.xlu0 %1269
        %1271 = vrot.lane.b32.xlu0 %v766, 12
        %v1272 = vpop.permute.xlu0 %1271
        %1273 = vrot.lane.b32.xlu0 %v767, 12
        %v1274 = vpop.permute.xlu0 %1273
        %1275 = vrot.lane.b32.xlu0 %v768, 12
        %v1276 = vpop.permute.xlu0 %1275
        %1277 = vrot.lane.b32.xlu0 %v769, 12
        %v1278 = vpop.permute.xlu0 %1277
        %1279 = vrot.lane.b32.xlu0 %v770, 12
        %v1280 = vpop.permute.xlu0 %1279
        %1281 = vrot.lane.b32.xlu0 %v771, 12
        %v1282 = vpop.permute.xlu0 %1281
        %1283 = vrot.lane.b32.xlu0 %v772, 12
        %v1284 = vpop.permute.xlu0 %1283
        %1285 = vrot.lane.b32.xlu0 %v773, 12
        %v1286 = vpop.permute.xlu0 %1285
        %1351 = vrot.lane.b32.xlu0 %v774, 16
        %v1352 = vpop.permute.xlu0 %1351
        %1353 = vrot.lane.b32.xlu0 %v775, 16
        %v1354 = vpop.permute.xlu0 %1353
        %1355 = vrot.lane.b32.xlu0 %v776, 16
        %v1356 = vpop.permute.xlu0 %1355
        %1357 = vrot.lane.b32.xlu0 %v777, 16
        %v1358 = vpop.permute.xlu0 %1357
        %1359 = vrot.lane.b32.xlu0 %v778, 16
        %v1360 = vpop.permute.xlu0 %1359
        %1361 = vrot.lane.b32.xlu0 %v779, 16
        %v1362 = vpop.permute.xlu0 %1361
        %1363 = vrot.lane.b32.xlu0 %v780, 16
        %v1364 = vpop.permute.xlu0 %1363
        %1365 = vrot.lane.b32.xlu0 %v781, 16
        %v1366 = vpop.permute.xlu0 %1365
        %1367 = vrot.lane.b32.xlu0 %v782, 16
        %v1368 = vpop.permute.xlu0 %1367
        %1369 = vrot.lane.b32.xlu0 %v783, 16
        %v1370 = vpop.permute.xlu0 %1369
        %1371 = vrot.lane.b32.xlu0 %v784, 16
        %v1372 = vpop.permute.xlu0 %1371
        %1373 = vrot.lane.b32.xlu0 %v785, 16
        %v1374 = vpop.permute.xlu0 %1373
        %1375 = vrot.lane.b32.xlu0 %v786, 16
        %v1376 = vpop.permute.xlu0 %1375
        %1377 = vrot.lane.b32.xlu0 %v787, 16
        %v1378 = vpop.permute.xlu0 %1377
        %1379 = vrot.lane.b32.xlu0 %v788, 16
        %v1380 = vpop.permute.xlu0 %1379
        %1381 = vrot.lane.b32.xlu0 %v789, 16
        %v1382 = vpop.permute.xlu0 %1381
        %1383 = vrot.lane.b32.xlu0 %v790, 16
        %v1384 = vpop.permute.xlu0 %1383
        %1385 = vrot.lane.b32.xlu0 %v791, 16
        %v1386 = vpop.permute.xlu0 %1385
        %1387 = vrot.lane.b32.xlu0 %v792, 16
        %v1388 = vpop.permute.xlu0 %1387
        %1389 = vrot.lane.b32.xlu0 %v793, 16
        %v1390 = vpop.permute.xlu0 %1389
        %1391 = vrot.lane.b32.xlu0 %v794, 16
        %v1392 = vpop.permute.xlu0 %1391
        %1393 = vrot.lane.b32.xlu0 %v795, 16
        %v1394 = vpop.permute.xlu0 %1393
        %1395 = vrot.lane.b32.xlu0 %v796, 16
        %v1396 = vpop.permute.xlu0 %1395
        %1397 = vrot.lane.b32.xlu0 %v797, 16
        %v1398 = vpop.permute.xlu0 %1397
        %1399 = vrot.lane.b32.xlu0 %v798, 16
        %v1400 = vpop.permute.xlu0 %1399
        %1401 = vrot.lane.b32.xlu0 %v799, 16
        %v1402 = vpop.permute.xlu0 %1401
        %1403 = vrot.lane.b32.xlu0 %v800, 16
        %v1404 = vpop.permute.xlu0 %1403
        %1405 = vrot.lane.b32.xlu0 %v801, 16
        %v1406 = vpop.permute.xlu0 %1405
        %1407 = vrot.lane.b32.xlu0 %v802, 16
        %v1408 = vpop.permute.xlu0 %1407
        %1409 = vrot.lane.b32.xlu0 %v803, 16
        %v1410 = vpop.permute.xlu0 %1409
        %1411 = vrot.lane.b32.xlu0 %v804, 16
        %v1412 = vpop.permute.xlu0 %1411
        %1413 = vrot.lane.b32.xlu0 %v805, 16
        %v1414 = vpop.permute.xlu0 %1413
        %1479 = vrot.lane.b32.xlu0 %v806, 20
        %v1480 = vpop.permute.xlu0 %1479
        %1481 = vrot.lane.b32.xlu0 %v807, 20
        %v1482 = vpop.permute.xlu0 %1481
        %1483 = vrot.lane.b32.xlu0 %v808, 20
        %v1484 = vpop.permute.xlu0 %1483
        %1485 = vrot.lane.b32.xlu0 %v809, 20
        %v1486 = vpop.permute.xlu0 %1485
        %1487 = vrot.lane.b32.xlu0 %v810, 20
        %v1488 = vpop.permute.xlu0 %1487
        %1489 = vrot.lane.b32.xlu0 %v811, 20
        %v1490 = vpop.permute.xlu0 %1489
        %1491 = vrot.lane.b32.xlu0 %v812, 20
        %v1492 = vpop.permute.xlu0 %1491
        %1493 = vrot.lane.b32.xlu0 %v813, 20
        %v1494 = vpop.permute.xlu0 %1493
        %1495 = vrot.lane.b32.xlu0 %v814, 20
        %v1496 = vpop.permute.xlu0 %1495
        %1497 = vrot.lane.b32.xlu0 %v815, 20
        %v1498 = vpop.permute.xlu0 %1497
        %1499 = vrot.lane.b32.xlu0 %v816, 20
        %v1500 = vpop.permute.xlu0 %1499
        %1501 = vrot.lane.b32.xlu0 %v817, 20
        %v1502 = vpop.permute.xlu0 %1501
        %1503 = vrot.lane.b32.xlu0 %v818, 20
        %v1504 = vpop.permute.xlu0 %1503
        %1505 = vrot.lane.b32.xlu0 %v819, 20
        %v1506 = vpop.permute.xlu0 %1505
        %1507 = vrot.lane.b32.xlu0 %v820, 20
        %v1508 = vpop.permute.xlu0 %1507
        %1509 = vrot.lane.b32.xlu0 %v821, 20
        %v1510 = vpop.permute.xlu0 %1509
        %1511 = vrot.lane.b32.xlu0 %v822, 20
        %v1512 = vpop.permute.xlu0 %1511
        %1513 = vrot.lane.b32.xlu0 %v823, 20
        %v1514 = vpop.permute.xlu0 %1513
        %1515 = vrot.lane.b32.xlu0 %v824, 20
        %v1516 = vpop.permute.xlu0 %1515
        %1517 = vrot.lane.b32.xlu0 %v825, 20
        %v1518 = vpop.permute.xlu0 %1517
        %1519 = vrot.lane.b32.xlu0 %v826, 20
        %v1520 = vpop.permute.xlu0 %1519
        %1521 = vrot.lane.b32.xlu0 %v827, 20
        %v1522 = vpop.permute.xlu0 %1521
        %1523 = vrot.lane.b32.xlu0 %v828, 20
        %v1524 = vpop.permute.xlu0 %1523
        %1525 = vrot.lane.b32.xlu0 %v829, 20
        %v1526 = vpop.permute.xlu0 %1525
        %1527 = vrot.lane.b32.xlu0 %v830, 20
        %v1528 = vpop.permute.xlu0 %1527
        %1529 = vrot.lane.b32.xlu0 %v831, 20
        %v1530 = vpop.permute.xlu0 %1529
        %1531 = vrot.lane.b32.xlu0 %v832, 20
        %v1532 = vpop.permute.xlu0 %1531
        %1533 = vrot.lane.b32.xlu0 %v833, 20
        %v1534 = vpop.permute.xlu0 %1533
        %1535 = vrot.lane.b32.xlu0 %v834, 20
        %v1536 = vpop.permute.xlu0 %1535
        %1537 = vrot.lane.b32.xlu0 %v835, 20
        %v1538 = vpop.permute.xlu0 %1537
        %1539 = vrot.lane.b32.xlu0 %v836, 20
        %v1540 = vpop.permute.xlu0 %1539
        %1541 = vrot.lane.b32.xlu0 %v837, 20
        %v1542 = vpop.permute.xlu0 %1541
        %1607 = vrot.lane.b32.xlu0 %v839, 24
        %v1608 = vpop.permute.xlu0 %1607
        %1609 = vrot.lane.b32.xlu0 %v840, 24
        %v1610 = vpop.permute.xlu0 %1609
        %1611 = vrot.lane.b32.xlu0 %v841, 24
        %v1612 = vpop.permute.xlu0 %1611
        %1613 = vrot.lane.b32.xlu0 %v842, 24
        %v1614 = vpop.permute.xlu0 %1613
        %1615 = vrot.lane.b32.xlu0 %v843, 24
        %v1616 = vpop.permute.xlu0 %1615
        %1617 = vrot.lane.b32.xlu0 %v844, 24
        %v1618 = vpop.permute.xlu0 %1617
        %1619 = vrot.lane.b32.xlu0 %v845, 24
        %v1620 = vpop.permute.xlu0 %1619
        %1621 = vrot.lane.b32.xlu0 %v846, 24
        %v1622 = vpop.permute.xlu0 %1621
        %1623 = vrot.lane.b32.xlu0 %v847, 24
        %v1624 = vpop.permute.xlu0 %1623
        %1625 = vrot.lane.b32.xlu0 %v848, 24
        %v1626 = vpop.permute.xlu0 %1625
        %1627 = vrot.lane.b32.xlu0 %v849, 24
        %v1628 = vpop.permute.xlu0 %1627
        %1629 = vrot.lane.b32.xlu0 %v850, 24
        %v1630 = vpop.permute.xlu0 %1629
        %1631 = vrot.lane.b32.xlu0 %v851, 24
        %v1632 = vpop.permute.xlu0 %1631
        %1633 = vrot.lane.b32.xlu0 %v852, 24
        %v1634 = vpop.permute.xlu0 %1633
        %1635 = vrot.lane.b32.xlu0 %v853, 24
        %v1636 = vpop.permute.xlu0 %1635
        %1637 = vrot.lane.b32.xlu0 %v854, 24
        %v1638 = vpop.permute.xlu0 %1637
        %1639 = vrot.lane.b32.xlu0 %v855, 24
        %v1640 = vpop.permute.xlu0 %1639
        %1641 = vrot.lane.b32.xlu0 %v856, 24
        %v1642 = vpop.permute.xlu0 %1641
        %1643 = vrot.lane.b32.xlu0 %v857, 24
        %v1644 = vpop.permute.xlu0 %1643
        %1645 = vrot.lane.b32.xlu0 %v858, 24
        %v1646 = vpop.permute.xlu0 %1645
        %1647 = vrot.lane.b32.xlu0 %v859, 24
        %v1648 = vpop.permute.xlu0 %1647
        %1649 = vrot.lane.b32.xlu0 %v860, 24
        %v1650 = vpop.permute.xlu0 %1649
        %1651 = vrot.lane.b32.xlu0 %v861, 24
        %v1652 = vpop.permute.xlu0 %1651
        %1653 = vrot.lane.b32.xlu0 %v862, 24
        %v1654 = vpop.permute.xlu0 %1653
        %1655 = vrot.lane.b32.xlu0 %v863, 24
        %v1656 = vpop.permute.xlu0 %1655
        %1657 = vrot.lane.b32.xlu0 %v864, 24
        %v1658 = vpop.permute.xlu0 %1657
        %1659 = vrot.lane.b32.xlu0 %v865, 24
        %v1660 = vpop.permute.xlu0 %1659
        %1661 = vrot.lane.b32.xlu0 %v866, 24
        %v1662 = vpop.permute.xlu0 %1661
        %1663 = vrot.lane.b32.xlu0 %v867, 24
        %v1664 = vpop.permute.xlu0 %1663
        %1665 = vrot.lane.b32.xlu0 %v868, 24
        %v1666 = vpop.permute.xlu0 %1665
        %1667 = vrot.lane.b32.xlu0 %v869, 24
        %v1668 = vpop.permute.xlu0 %1667
        %1669 = vrot.lane.b32.xlu0 %v870, 24
        %v1670 = vpop.permute.xlu0 %1669
        %1735 = vrot.lane.b32.xlu0 %v871, 28
        %v1736 = vpop.permute.xlu0 %1735
        %1737 = vrot.lane.b32.xlu0 %v872, 28
        %v1738 = vpop.permute.xlu0 %1737
        %1739 = vrot.lane.b32.xlu0 %v873, 28
        %v1740 = vpop.permute.xlu0 %1739
        %1741 = vrot.lane.b32.xlu0 %v874, 28
        %v1742 = vpop.permute.xlu0 %1741
        %1743 = vrot.lane.b32.xlu0 %v875, 28
        %v1744 = vpop.permute.xlu0 %1743
        %1745 = vrot.lane.b32.xlu0 %v876, 28
        %v1746 = vpop.permute.xlu0 %1745
        %1747 = vrot.lane.b32.xlu0 %v877, 28
        %v1748 = vpop.permute.xlu0 %1747
        %1749 = vrot.lane.b32.xlu0 %v878, 28
        %v1750 = vpop.permute.xlu0 %1749
        %1751 = vrot.lane.b32.xlu0 %v879, 28
        %v1752 = vpop.permute.xlu0 %1751
        %1753 = vrot.lane.b32.xlu0 %v880, 28
        %v1754 = vpop.permute.xlu0 %1753
        %1755 = vrot.lane.b32.xlu0 %v881, 28
        %v1756 = vpop.permute.xlu0 %1755
        %1757 = vrot.lane.b32.xlu0 %v882, 28
        %v1758 = vpop.permute.xlu0 %1757
        %1759 = vrot.lane.b32.xlu0 %v883, 28
        %v1760 = vpop.permute.xlu0 %1759
        %1761 = vrot.lane.b32.xlu0 %v884, 28
        %v1762 = vpop.permute.xlu0 %1761
        %1763 = vrot.lane.b32.xlu0 %v885, 28
        %v1764 = vpop.permute.xlu0 %1763
        %1765 = vrot.lane.b32.xlu0 %v886, 28
        %v1766 = vpop.permute.xlu0 %1765
        %1767 = vrot.lane.b32.xlu0 %v887, 28
        %v1768 = vpop.permute.xlu0 %1767
        %1769 = vrot.lane.b32.xlu0 %v888, 28
        %v1770 = vpop.permute.xlu0 %1769
        %1771 = vrot.lane.b32.xlu0 %v889, 28
        %v1772 = vpop.permute.xlu0 %1771
        %1773 = vrot.lane.b32.xlu0 %v890, 28
        %v1774 = vpop.permute.xlu0 %1773
        %1775 = vrot.lane.b32.xlu0 %v891, 28
        %v1776 = vpop.permute.xlu0 %1775
        %1777 = vrot.lane.b32.xlu0 %v892, 28
        %v1778 = vpop.permute.xlu0 %1777
        %1779 = vrot.lane.b32.xlu0 %v893, 28
        %v1780 = vpop.permute.xlu0 %1779
        %1781 = vrot.lane.b32.xlu0 %v894, 28
        %v1782 = vpop.permute.xlu0 %1781
        %1783 = vrot.lane.b32.xlu0 %v895, 28
        %v1784 = vpop.permute.xlu0 %1783
        %1785 = vrot.lane.b32.xlu0 %v896, 28
        %v1786 = vpop.permute.xlu0 %1785
        %1787 = vrot.lane.b32.xlu0 %v897, 28
        %v1788 = vpop.permute.xlu0 %1787
        %1789 = vrot.lane.b32.xlu0 %v898, 28
        %v1790 = vpop.permute.xlu0 %1789
        %1791 = vrot.lane.b32.xlu0 %v899, 28
        %v1792 = vpop.permute.xlu0 %1791
        %1793 = vrot.lane.b32.xlu0 %v900, 28
        %v1794 = vpop.permute.xlu0 %1793
        %1795 = vrot.lane.b32.xlu0 %v901, 28
        %v1796 = vpop.permute.xlu0 %1795
        %1797 = vrot.lane.b32.xlu0 %v902, 28
        %v1798 = vpop.permute.xlu0 %1797
        %1863 = vrot.lane.b32.xlu0 %v903, 32
        %v1864 = vpop.permute.xlu0 %1863
        %1865 = vrot.lane.b32.xlu0 %v904, 32
        %v1866 = vpop.permute.xlu0 %1865
        %1867 = vrot.lane.b32.xlu0 %v905, 32
        %v1868 = vpop.permute.xlu0 %1867
        %1869 = vrot.lane.b32.xlu0 %v906, 32
        %v1870 = vpop.permute.xlu0 %1869
        %1871 = vrot.lane.b32.xlu0 %v907, 32
        %v1872 = vpop.permute.xlu0 %1871
        %1873 = vrot.lane.b32.xlu0 %v908, 32
        %v1874 = vpop.permute.xlu0 %1873
        %1875 = vrot.lane.b32.xlu0 %v909, 32
        %v1876 = vpop.permute.xlu0 %1875
        %1877 = vrot.lane.b32.xlu0 %v910, 32
        %v1878 = vpop.permute.xlu0 %1877
        %1879 = vrot.lane.b32.xlu0 %v911, 32
        %v1880 = vpop.permute.xlu0 %1879
        %1881 = vrot.lane.b32.xlu0 %v912, 32
        %v1882 = vpop.permute.xlu0 %1881
        %1883 = vrot.lane.b32.xlu0 %v913, 32
        %v1884 = vpop.permute.xlu0 %1883
        %1885 = vrot.lane.b32.xlu0 %v914, 32
        %v1886 = vpop.permute.xlu0 %1885
        %1887 = vrot.lane.b32.xlu0 %v915, 32
        %v1888 = vpop.permute.xlu0 %1887
        %1889 = vrot.lane.b32.xlu0 %v916, 32
        %v1890 = vpop.permute.xlu0 %1889
        %1891 = vrot.lane.b32.xlu0 %v917, 32
        %v1892 = vpop.permute.xlu0 %1891
        %1893 = vrot.lane.b32.xlu0 %v918, 32
        %v1894 = vpop.permute.xlu0 %1893
        %1895 = vrot.lane.b32.xlu0 %v919, 32
        %v1896 = vpop.permute.xlu0 %1895
        %1897 = vrot.lane.b32.xlu0 %v920, 32
        %v1898 = vpop.permute.xlu0 %1897
        %1899 = vrot.lane.b32.xlu0 %v921, 32
        %v1900 = vpop.permute.xlu0 %1899
        %1901 = vrot.lane.b32.xlu0 %v922, 32
        %v1902 = vpop.permute.xlu0 %1901
        %1903 = vrot.lane.b32.xlu0 %v923, 32
        %v1904 = vpop.permute.xlu0 %1903
        %1905 = vrot.lane.b32.xlu0 %v924, 32
        %v1906 = vpop.permute.xlu0 %1905
        %1907 = vrot.lane.b32.xlu0 %v925, 32
        %v1908 = vpop.permute.xlu0 %1907
        %1909 = vrot.lane.b32.xlu0 %v926, 32
        %v1910 = vpop.permute.xlu0 %1909
        %1911 = vrot.lane.b32.xlu0 %v927, 32
        %v1912 = vpop.permute.xlu0 %1911
        %1913 = vrot.lane.b32.xlu0 %v928, 32
        %v1914 = vpop.permute.xlu0 %1913
        %1915 = vrot.lane.b32.xlu0 %v929, 32
        %v1916 = vpop.permute.xlu0 %1915
        %1917 = vrot.lane.b32.xlu0 %v930, 32
        %v1918 = vpop.permute.xlu0 %1917
        %1919 = vrot.lane.b32.xlu0 %v931, 32
        %v1920 = vpop.permute.xlu0 %1919
        %1921 = vrot.lane.b32.xlu0 %v932, 32
        %v1922 = vpop.permute.xlu0 %1921
        %1923 = vrot.lane.b32.xlu0 %v933, 32
        %v1924 = vpop.permute.xlu0 %1923
        %1925 = vrot.lane.b32.xlu0 %v934, 32
        %v1926 = vpop.permute.xlu0 %1925
        %v1959 = vsel %vm557, %v646, %v968
        %v1960 = vsel %vm557, %v647, %v970
        %v1961 = vsel %vm557, %v648, %v972
        %v1962 = vsel %vm557, %v649, %v974
        %v1963 = vsel %vm557, %v650, %v976
        %v1964 = vsel %vm557, %v651, %v978
        %v1965 = vsel %vm557, %v652, %v980
        %v1966 = vsel %vm557, %v653, %v982
        %v1967 = vsel %vm557, %v654, %v984
        %v1968 = vsel %vm557, %v655, %v986
        %v1969 = vsel %vm557, %v656, %v988
        %v1970 = vsel %vm557, %v657, %v990
        %v1971 = vsel %vm557, %v658, %v992
        %v1972 = vsel %vm557, %v659, %v994
        %v1973 = vsel %vm557, %v660, %v996
        %v1974 = vsel %vm557, %v661, %v998
        %v1975 = vsel %vm557, %v662, %v1000
        %v1976 = vsel %vm557, %v663, %v1002
        %v1977 = vsel %vm557, %v664, %v1004
        %v1978 = vsel %vm557, %v665, %v1006
        %v1979 = vsel %vm557, %v666, %v1008
        %v1980 = vsel %vm557, %v667, %v1010
        %v1981 = vsel %vm557, %v668, %v1012
        %v1982 = vsel %vm557, %v669, %v1014
        %v1983 = vsel %vm557, %v670, %v1016
        %v1984 = vsel %vm557, %v671, %v1018
        %v1985 = vsel %vm557, %v672, %v1020
        %v1986 = vsel %vm557, %v673, %v1022
        %v1987 = vsel %vm557, %v674, %v1024
        %v1988 = vsel %vm557, %v675, %v1026
        %v1989 = vsel %vm557, %v676, %v1028
        %v1990 = vsel %vm557, %v677, %v1030
        %vm1991 = vcmask 64512
        %v1992 = vsel %vm1991, %v1959, %v1096
        %v1993 = vsel %vm1991, %v1960, %v1098
        %v1994 = vsel %vm1991, %v1961, %v1100
        %v1995 = vsel %vm1991, %v1962, %v1102
        %v1996 = vsel %vm1991, %v1963, %v1104
        %v1997 = vsel %vm1991, %v1964, %v1106
        %v1998 = vsel %vm1991, %v1965, %v1108
        %v1999 = vsel %vm1991, %v1966, %v1110
        %v2000 = vsel %vm1991, %v1967, %v1112
        %v2001 = vsel %vm1991, %v1968, %v1114
        %v2002 = vsel %vm1991, %v1969, %v1116
        %v2003 = vsel %vm1991, %v1970, %v1118
        %v2004 = vsel %vm1991, %v1971, %v1120
        %v2005 = vsel %vm1991, %v1972, %v1122
        %v2006 = vsel %vm1991, %v1973, %v1124
        %v2007 = vsel %vm1991, %v1974, %v1126
        %v2008 = vsel %vm1991, %v1975, %v1128
        %v2009 = vsel %vm1991, %v1976, %v1130
        %v2010 = vsel %vm1991, %v1977, %v1132
        %v2011 = vsel %vm1991, %v1978, %v1134
        %v2012 = vsel %vm1991, %v1979, %v1136
        %v2013 = vsel %vm1991, %v1980, %v1138
        %v2014 = vsel %vm1991, %v1981, %v1140
        %v2015 = vsel %vm1991, %v1982, %v1142
        %v2016 = vsel %vm1991, %v1983, %v1144
        %v2017 = vsel %vm1991, %v1984, %v1146
        %v2018 = vsel %vm1991, %v1985, %v1148
        %v2019 = vsel %vm1991, %v1986, %v1150
        %v2020 = vsel %vm1991, %v1987, %v1152
        %v2021 = vsel %vm1991, %v1988, %v1154
        %v2022 = vsel %vm1991, %v1989, %v1156
        %v2023 = vsel %vm1991, %v1990, %v1158
        %vm2024 = vcmask 97280
        %v2025 = vsel %vm2024, %v1992, %v1224
        %v2026 = vsel %vm2024, %v1993, %v1226
        %v2027 = vsel %vm2024, %v1994, %v1228
        %v2028 = vsel %vm2024, %v1995, %v1230
        %v2029 = vsel %vm2024, %v1996, %v1232
        %v2030 = vsel %vm2024, %v1997, %v1234
        %v2031 = vsel %vm2024, %v1998, %v1236
        %v2032 = vsel %vm2024, %v1999, %v1238
        %v2033 = vsel %vm2024, %v2000, %v1240
        %v2034 = vsel %vm2024, %v2001, %v1242
        %v2035 = vsel %vm2024, %v2002, %v1244
        %v2036 = vsel %vm2024, %v2003, %v1246
        %v2037 = vsel %vm2024, %v2004, %v1248
        %v2038 = vsel %vm2024, %v2005, %v1250
        %v2039 = vsel %vm2024, %v2006, %v1252
        %v2040 = vsel %vm2024, %v2007, %v1254
        %v2041 = vsel %vm2024, %v2008, %v1256
        %v2042 = vsel %vm2024, %v2009, %v1258
        %v2043 = vsel %vm2024, %v2010, %v1260
        %v2044 = vsel %vm2024, %v2011, %v1262
        %v2045 = vsel %vm2024, %v2012, %v1264
        %v2046 = vsel %vm2024, %v2013, %v1266
        %v2047 = vsel %vm2024, %v2014, %v1268
        %v2048 = vsel %vm2024, %v2015, %v1270
        %v2049 = vsel %vm2024, %v2016, %v1272
        %v2050 = vsel %vm2024, %v2017, %v1274
        %v2051 = vsel %vm2024, %v2018, %v1276
        %v2052 = vsel %vm2024, %v2019, %v1278
        %v2053 = vsel %vm2024, %v2020, %v1280
        %v2054 = vsel %vm2024, %v2021, %v1282
        %v2055 = vsel %vm2024, %v2022, %v1284
        %v2056 = vsel %vm2024, %v2023, %v1286
        %vm2057 = vcmask 130048
        %v2058 = vsel %vm2057, %v2025, %v1352
        %v2059 = vsel %vm2057, %v2026, %v1354
        %v2060 = vsel %vm2057, %v2027, %v1356
        %v2061 = vsel %vm2057, %v2028, %v1358
        %v2062 = vsel %vm2057, %v2029, %v1360
        %v2063 = vsel %vm2057, %v2030, %v1362
        %v2064 = vsel %vm2057, %v2031, %v1364
        %v2065 = vsel %vm2057, %v2032, %v1366
        %v2066 = vsel %vm2057, %v2033, %v1368
        %v2067 = vsel %vm2057, %v2034, %v1370
        %v2068 = vsel %vm2057, %v2035, %v1372
        %v2069 = vsel %vm2057, %v2036, %v1374
        %v2070 = vsel %vm2057, %v2037, %v1376
        %v2071 = vsel %vm2057, %v2038, %v1378
        %v2072 = vsel %vm2057, %v2039, %v1380
        %v2073 = vsel %vm2057, %v2040, %v1382
        %v2074 = vsel %vm2057, %v2041, %v1384
        %v2075 = vsel %vm2057, %v2042, %v1386
        %v2076 = vsel %vm2057, %v2043, %v1388
        %v2077 = vsel %vm2057, %v2044, %v1390
        %v2078 = vsel %vm2057, %v2045, %v1392
        %v2079 = vsel %vm2057, %v2046, %v1394
        %v2080 = vsel %vm2057, %v2047, %v1396
        %v2081 = vsel %vm2057, %v2048, %v1398
        %v2082 = vsel %vm2057, %v2049, %v1400
        %v2083 = vsel %vm2057, %v2050, %v1402
        %v2084 = vsel %vm2057, %v2051, %v1404
        %v2085 = vsel %vm2057, %v2052, %v1406
        %v2086 = vsel %vm2057, %v2053, %v1408
        %v2087 = vsel %vm2057, %v2054, %v1410
        %v2088 = vsel %vm2057, %v2055, %v1412
        %v2089 = vsel %vm2057, %v2056, %v1414
        %vm2090 = vcmask 162816
        %v2091 = vsel %vm2090, %v2058, %v1480
        %v2092 = vsel %vm2090, %v2059, %v1482
        %v2093 = vsel %vm2090, %v2060, %v1484
        %v2094 = vsel %vm2090, %v2061, %v1486
        %v2095 = vsel %vm2090, %v2062, %v1488
        %v2096 = vsel %vm2090, %v2063, %v1490
        %v2097 = vsel %vm2090, %v2064, %v1492
        %v2098 = vsel %vm2090, %v2065, %v1494
        %v2099 = vsel %vm2090, %v2066, %v1496
        %v2100 = vsel %vm2090, %v2067, %v1498
        %v2101 = vsel %vm2090, %v2068, %v1500
        %v2102 = vsel %vm2090, %v2069, %v1502
        %v2103 = vsel %vm2090, %v2070, %v1504
        %v2104 = vsel %vm2090, %v2071, %v1506
        %v2105 = vsel %vm2090, %v2072, %v1508
        %v2106 = vsel %vm2090, %v2073, %v1510
        %v2107 = vsel %vm2090, %v2074, %v1512
        %v2108 = vsel %vm2090, %v2075, %v1514
        %v2109 = vsel %vm2090, %v2076, %v1516
        %v2110 = vsel %vm2090, %v2077, %v1518
        %v2111 = vsel %vm2090, %v2078, %v1520
        %v2112 = vsel %vm2090, %v2079, %v1522
        %v2113 = vsel %vm2090, %v2080, %v1524
        %v2114 = vsel %vm2090, %v2081, %v1526
        %v2115 = vsel %vm2090, %v2082, %v1528
        %v2116 = vsel %vm2090, %v2083, %v1530
        %v2117 = vsel %vm2090, %v2084, %v1532
        %v2118 = vsel %vm2090, %v2085, %v1534
        %v2119 = vsel %vm2090, %v2086, %v1536
        %v2120 = vsel %vm2090, %v2087, %v1538
        %v2121 = vsel %vm2090, %v2088, %v1540
        %v2122 = vsel %vm2090, %v2089, %v1542
        %vm2123 = vcmask 195584
        %v2124 = vsel %vm2123, %v2091, %v1608
        %v2125 = vsel %vm2123, %v2092, %v1610
        %v2126 = vsel %vm2123, %v2093, %v1612
        %v2127 = vsel %vm2123, %v2094, %v1614
        %v2128 = vsel %vm2123, %v2095, %v1616
        %v2129 = vsel %vm2123, %v2096, %v1618
        %v2130 = vsel %vm2123, %v2097, %v1620
        %v2131 = vsel %vm2123, %v2098, %v1622
        %v2132 = vsel %vm2123, %v2099, %v1624
        %v2133 = vsel %vm2123, %v2100, %v1626
        %v2134 = vsel %vm2123, %v2101, %v1628
        %v2135 = vsel %vm2123, %v2102, %v1630
        %v2136 = vsel %vm2123, %v2103, %v1632
        %v2137 = vsel %vm2123, %v2104, %v1634
        %v2138 = vsel %vm2123, %v2105, %v1636
        %v2139 = vsel %vm2123, %v2106, %v1638
        %v2140 = vsel %vm2123, %v2107, %v1640
        %v2141 = vsel %vm2123, %v2108, %v1642
        %v2142 = vsel %vm2123, %v2109, %v1644
        %v2143 = vsel %vm2123, %v2110, %v1646
        %v2144 = vsel %vm2123, %v2111, %v1648
        %v2145 = vsel %vm2123, %v2112, %v1650
        %v2146 = vsel %vm2123, %v2113, %v1652
        %v2147 = vsel %vm2123, %v2114, %v1654
        %v2148 = vsel %vm2123, %v2115, %v1656
        %v2149 = vsel %vm2123, %v2116, %v1658
        %v2150 = vsel %vm2123, %v2117, %v1660
        %v2151 = vsel %vm2123, %v2118, %v1662
        %v2152 = vsel %vm2123, %v2119, %v1664
        %v2153 = vsel %vm2123, %v2120, %v1666
        %v2154 = vsel %vm2123, %v2121, %v1668
        %v2155 = vsel %vm2123, %v2122, %v1670
        %vm2156 = vcmask 228352
        %v2157 = vsel %vm2156, %v2124, %v1736
        %v2158 = vsel %vm2156, %v2125, %v1738
        %v2159 = vsel %vm2156, %v2126, %v1740
        %v2160 = vsel %vm2156, %v2127, %v1742
        %v2161 = vsel %vm2156, %v2128, %v1744
        %v2162 = vsel %vm2156, %v2129, %v1746
        %v2163 = vsel %vm2156, %v2130, %v1748
        %v2164 = vsel %vm2156, %v2131, %v1750
        %v2165 = vsel %vm2156, %v2132, %v1752
        %v2166 = vsel %vm2156, %v2133, %v1754
        %v2167 = vsel %vm2156, %v2134, %v1756
        %v2168 = vsel %vm2156, %v2135, %v1758
        %v2169 = vsel %vm2156, %v2136, %v1760
        %v2170 = vsel %vm2156, %v2137, %v1762
        %v2171 = vsel %vm2156, %v2138, %v1764
        %v2172 = vsel %vm2156, %v2139, %v1766
        %v2173 = vsel %vm2156, %v2140, %v1768
        %v2174 = vsel %vm2156, %v2141, %v1770
        %v2175 = vsel %vm2156, %v2142, %v1772
        %v2176 = vsel %vm2156, %v2143, %v1774
        %v2177 = vsel %vm2156, %v2144, %v1776
        %v2178 = vsel %vm2156, %v2145, %v1778
        %v2179 = vsel %vm2156, %v2146, %v1780
        %v2180 = vsel %vm2156, %v2147, %v1782
        %v2181 = vsel %vm2156, %v2148, %v1784
        %v2182 = vsel %vm2156, %v2149, %v1786
        %v2183 = vsel %vm2156, %v2150, %v1788
        %v2184 = vsel %vm2156, %v2151, %v1790
        %v2185 = vsel %vm2156, %v2152, %v1792
        %v2186 = vsel %vm2156, %v2153, %v1794
        %v2187 = vsel %vm2156, %v2154, %v1796
        %v2188 = vsel %vm2156, %v2155, %v1798
        %v2189 = vsel %vm315, %v2157, %v1864
        %v2190 = vsel %vm315, %v2158, %v1866
        %v2191 = vsel %vm315, %v2159, %v1868
        %v2192 = vsel %vm315, %v2160, %v1870
        %v2193 = vsel %vm315, %v2161, %v1872
        %v2194 = vsel %vm315, %v2162, %v1874
        %v2195 = vsel %vm315, %v2163, %v1876
        %v2196 = vsel %vm315, %v2164, %v1878
        %v2197 = vsel %vm315, %v2165, %v1880
        %v2198 = vsel %vm315, %v2166, %v1882
        %v2199 = vsel %vm315, %v2167, %v1884
        %v2200 = vsel %vm315, %v2168, %v1886
        %v2201 = vsel %vm315, %v2169, %v1888
        %v2202 = vsel %vm315, %v2170, %v1890
        %v2203 = vsel %vm315, %v2171, %v1892
        %v2204 = vsel %vm315, %v2172, %v1894
        %v2205 = vsel %vm315, %v2173, %v1896
        %v2206 = vsel %vm315, %v2174, %v1898
        %v2207 = vsel %vm315, %v2175, %v1900
        %v2208 = vsel %vm315, %v2176, %v1902
        %v2209 = vsel %vm315, %v2177, %v1904
        %v2210 = vsel %vm315, %v2178, %v1906
        %v2211 = vsel %vm315, %v2179, %v1908
        %v2212 = vsel %vm315, %v2180, %v1910
        %v2213 = vsel %vm315, %v2181, %v1912
        %v2214 = vsel %vm315, %v2182, %v1914
        %v2215 = vsel %vm315, %v2183, %v1916
        %v2216 = vsel %vm315, %v2184, %v1918
        %v2217 = vsel %vm315, %v2185, %v1920
        %v2218 = vsel %vm315, %v2186, %v1922
        %v2219 = vsel %vm315, %v2187, %v1924
        %v2220 = vsel %vm315, %v2188, %v1926
        %v2221 = vpack.c.bf16 %v2190, %v2189
        %v2222 = vpack.c.bf16 %v2192, %v2191
        %v2223 = vpack.c.bf16 %v2194, %v2193
        %v2224 = vpack.c.bf16 %v2196, %v2195
        %v2225 = vpack.c.bf16 %v2198, %v2197
        %v2226 = vpack.c.bf16 %v2200, %v2199
        %v2227 = vpack.c.bf16 %v2202, %v2201
        %v2228 = vpack.c.bf16 %v2204, %v2203
        %v2229 = vpack.c.bf16 %v2206, %v2205
        %v2230 = vpack.c.bf16 %v2208, %v2207
        %v2231 = vpack.c.bf16 %v2210, %v2209
        %v2232 = vpack.c.bf16 %v2212, %v2211
        %v2233 = vpack.c.bf16 %v2214, %v2213
        %v2234 = vpack.c.bf16 %v2216, %v2215
        %v2235 = vpack.c.bf16 %v2218, %v2217
        %v2236 = vpack.c.bf16 %v2220, %v2219
        %v2237 = vld [vmem:[%s3] sm:$0xf]
        %v2238 = vld [vmem:[%s3 + $0x4] sm:$0xf]
        %v2239 = vld [vmem:[%s3 + $0x8] sm:$0xf]
        %v2240 = vld [vmem:[%s3 + $0xc] sm:$0xf]
        %v2241 = vld [vmem:[%s3 + $0x10] sm:$0x3]
        %v2242 = vld [vmem:[%s4] sm:$0x1]
        %v2244 = vlaneseq
        %v2245 = vshrl.u32 %v2244, 7
        %v2246 = vsub.s32 0, %v2245
        %v2247 = vrot.slane %v2242, %v2246
        %v2254 = vunpack.c.l.b16 %v2237
        %v2255 = vunpack.c.l.b16 %v2238
        %v2256 = vunpack.c.l.b16 %v2239
        %v2257 = vunpack.c.l.b16 %v2240
        %v2258 = vunpack.c.l.b16 %v2241
        %v2259 = vpack.c.b16 %v2255, %v2254
        %v2260 = vpack.c.b16 %v2257, %v2256
        %v2261 = vpack.c.b16 %v2258, %v2258
        %vm2264 = vcmask 293888
        %v2266 = vsel %vm2264, %v2221, 0
        %v2269 = vsel %vm2264, %v2222, 0
        %v2272 = vsel %vm2264, %v2223, 0
        %v2275 = vsel %vm2264, %v2224, 0
        %v2278 = vsel %vm2264, %v2225, 0
        %v2281 = vsel %vm2264, %v2226, 0
        %v2284 = vsel %vm2264, %v2227, 0
        %v2287 = vsel %vm2264, %v2228, 0
        %v2290 = vsel %vm2264, %v2229, 0
        %v2293 = vsel %vm2264, %v2230, 0
        %v2296 = vsel %vm2264, %v2231, 0
        %v2299 = vsel %vm2264, %v2232, 0
        %v2302 = vsel %vm2264, %v2233, 0
        %v2305 = vsel %vm2264, %v2234, 0
        %v2308 = vsel %vm2264, %v2235, 0
        %v2311 = vsel %vm2264, %v2236, 0
        %vm2313 = vcmask 1041408
        %v2315 = vsel %vm2313, %v2261, 0
        %2317 = vmatprep.subr.bf16.mxu0 0
        %2318 = vmatpush1.bf16.msra.mxu0 %v2259
        %2319 = vmatprep.subr.bf16.mxu0 0
        %2320 = vmatpush1.bf16.msra.mxu0 %v2260
        %2321 = vmatprep.subr.bf16.mxu0 0
        %2322 = vmatpush1.bf16.msra.mxu0 %v2315
        %2323 = vmatprep.subr.bf16.mxu0 0
        %2324 = vmatpush1.bf16.msra.mxu0 0
        %2325 = vmatprep.subr.bf16.mxu0 0
        %2326 = vmatpush1.bf16.msra.mxu0 0
        %2327 = vmatprep.subr.bf16.mxu0 0
        %2328 = vmatpush1.bf16.msra.mxu0 0
        %2329 = vmatprep.subr.bf16.mxu0 0
        %2330 = vmatpush1.bf16.msra.mxu0 0
        %2331 = vmatprep.subr.bf16.mxu0 0
        %2332 = vmatpush1.bf16.msra.mxu0 0
        %2333 = vmatprep.subr.bf16.mxu0 0
        %2334 = vmatpush1.bf16.msra.mxu0 0
        %2335 = vmatprep.subr.bf16.mxu0 0
        %2336 = vmatpush1.bf16.msra.mxu0 0
        %2337 = vmatprep.subr.bf16.mxu0 0
        %2338 = vmatpush1.bf16.msra.mxu0 0
        %2339 = vmatprep.subr.bf16.mxu0 0
        %2340 = vmatpush1.bf16.msra.mxu0 0
        %2341 = vmatprep.subr.bf16.mxu0 0
        %2342 = vmatpush1.bf16.msra.mxu0 0
        %2343 = vmatprep.subr.bf16.mxu0 0
        %2344 = vmatpush1.bf16.msra.mxu0 0
        %2345 = vmatprep.subr.bf16.mxu0 0
        %2346 = vmatpush1.bf16.msra.mxu0 0
        %2347 = vmatprep.subr.bf16.mxu0 0
        %2348 = vmatpush1.bf16.msra.mxu0 0
        %2349 = vmatprep.mubr.bf16.mxu0 0
        %2350 = vmatmul.mubr.bf16.gmra.mrb[0].mxu0 %v2266
        %v2351 = vpop.f32.mrb[0].mxu0
        %v2352 = vadd.f32 %v2247, %v2351
        %v2353 = vpop.f32.mrb[0].mxu0
        %v2354 = vpop.f32.mrb[0].mxu0
        %v2355 = vadd.f32 %v2247, %v2354
        %v2356 = vpop.f32.mrb[0].mxu0
        %2357 = vmatprep.mubr.bf16.mxu0 0
        %2358 = vmatmul.mubr.bf16.gmra.mrb[0].mxu0 %v2269
        %v2359 = vpop.f32.mrb[0].mxu0
        %v2360 = vadd.f32 %v2247, %v2359
        %v2361 = vpop.f32.mrb[0].mxu0
        %v2362 = vpop.f32.mrb[0].mxu0
        %v2363 = vadd.f32 %v2247, %v2362
        %v2364 = vpop.f32.mrb[0].mxu0
        %2365 = vmatprep.mubr.bf16.mxu0 0
        %2366 = vmatmul.mubr.bf16.gmra.mrb[0].mxu0 %v2272
        %v2367 = vpop.f32.mrb[0].mxu0
        %v2368 = vadd.f32 %v2247, %v2367
        %v2369 = vpop.f32.mrb[0].mxu0
        %v2370 = vpop.f32.mrb[0].mxu0
        %v2371 = vadd.f32 %v2247, %v2370
        %v2372 = vpop.f32.mrb[0].mxu0
        %2373 = vmatprep.mubr.bf16.mxu0 0
        %2374 = vmatmul.mubr.bf16.gmra.mrb[0].mxu0 %v2275
        %v2375 = vpop.f32.mrb[0].mxu0
        %v2376 = vadd.f32 %v2247, %v2375
        %v2377 = vpop.f32.mrb[0].mxu0
        %v2378 = vpop.f32.mrb[0].mxu0
        %v2379 = vadd.f32 %v2247, %v2378
        %v2380 = vpop.f32.mrb[0].mxu0
        %2381 = vmatprep.mubr.bf16.mxu0 0
        %2382 = vmatmul.mubr.bf16.gmra.mrb[0].mxu0 %v2278
        %v2383 = vpop.f32.mrb[0].mxu0
        %v2384 = vadd.f32 %v2247, %v2383
        %v2385 = vpop.f32.mrb[0].mxu0
        %v2386 = vpop.f32.mrb[0].mxu0
        %v2387 = vadd.f32 %v2247, %v2386
        %v2388 = vpop.f32.mrb[0].mxu0
        %2389 = vmatprep.mubr.bf16.mxu0 0
        %2390 = vmatmul.mubr.bf16.gmra.mrb[0].mxu0 %v2281
        %v2391 = vpop.f32.mrb[0].mxu0
        %v2392 = vadd.f32 %v2247, %v2391
        %v2393 = vpop.f32.mrb[0].mxu0
        %v2394 = vpop.f32.mrb[0].mxu0
        %v2395 = vadd.f32 %v2247, %v2394
        %v2396 = vpop.f32.mrb[0].mxu0
        %2397 = vmatprep.mubr.bf16.mxu0 0
        %2398 = vmatmul.mubr.bf16.gmra.mrb[0].mxu0 %v2284
        %v2399 = vpop.f32.mrb[0].mxu0
        %v2400 = vadd.f32 %v2247, %v2399
        %v2401 = vpop.f32.mrb[0].mxu0
        %v2402 = vpop.f32.mrb[0].mxu0
        %v2403 = vadd.f32 %v2247, %v2402
        %v2404 = vpop.f32.mrb[0].mxu0
        %2405 = vmatprep.mubr.bf16.mxu0 0
        %2406 = vmatmul.mubr.bf16.gmra.mrb[0].mxu0 %v2287
        %v2407 = vpop.f32.mrb[0].mxu0
        %v2408 = vadd.f32 %v2247, %v2407
        %v2409 = vpop.f32.mrb[0].mxu0
        %v2410 = vpop.f32.mrb[0].mxu0
        %v2411 = vadd.f32 %v2247, %v2410
        %v2412 = vpop.f32.mrb[0].mxu0
        %2413 = vmatprep.mubr.bf16.mxu0 0
        %2414 = vmatmul.mubr.bf16.gmra.mrb[0].mxu0 %v2290
        %v2415 = vpop.f32.mrb[0].mxu0
        %v2416 = vadd.f32 %v2247, %v2415
        %v2417 = vpop.f32.mrb[0].mxu0
        %v2418 = vpop.f32.mrb[0].mxu0
        %v2419 = vadd.f32 %v2247, %v2418
        %v2420 = vpop.f32.mrb[0].mxu0
        %2421 = vmatprep.mubr.bf16.mxu0 0
        %2422 = vmatmul.mubr.bf16.gmra.mrb[0].mxu0 %v2293
        %v2423 = vpop.f32.mrb[0].mxu0
        %v2424 = vadd.f32 %v2247, %v2423
        %v2425 = vpop.f32.mrb[0].mxu0
        %v2426 = vpop.f32.mrb[0].mxu0
        %v2427 = vadd.f32 %v2247, %v2426
        %v2428 = vpop.f32.mrb[0].mxu0
        %2429 = vmatprep.mubr.bf16.mxu0 0
        %2430 = vmatmul.mubr.bf16.gmra.mrb[0].mxu0 %v2296
        %v2431 = vpop.f32.mrb[0].mxu0
        %v2432 = vadd.f32 %v2247, %v2431
        %v2433 = vpop.f32.mrb[0].mxu0
        %v2434 = vpop.f32.mrb[0].mxu0
        %v2435 = vadd.f32 %v2247, %v2434
        %v2436 = vpop.f32.mrb[0].mxu0
        %2437 = vmatprep.mubr.bf16.mxu0 0
        %2438 = vmatmul.mubr.bf16.gmra.mrb[0].mxu0 %v2299
        %v2439 = vpop.f32.mrb[0].mxu0
        %v2440 = vadd.f32 %v2247, %v2439
        %v2441 = vpop.f32.mrb[0].mxu0
        %v2442 = vpop.f32.mrb[0].mxu0
        %v2443 = vadd.f32 %v2247, %v2442
        %v2444 = vpop.f32.mrb[0].mxu0
        %2445 = vmatprep.mubr.bf16.mxu0 0
        %2446 = vmatmul.mubr.bf16.gmra.mrb[0].mxu0 %v2302
        %v2447 = vpop.f32.mrb[0].mxu0
        %v2448 = vadd.f32 %v2247, %v2447
        %v2449 = vpop.f32.mrb[0].mxu0
        %v2450 = vpop.f32.mrb[0].mxu0
        %v2451 = vadd.f32 %v2247, %v2450
        %v2452 = vpop.f32.mrb[0].mxu0
        %2453 = vmatprep.mubr.bf16.mxu0 0
        %2454 = vmatmul.mubr.bf16.gmra.mrb[0].mxu0 %v2305
        %v2455 = vpop.f32.mrb[0].mxu0
        %v2456 = vadd.f32 %v2247, %v2455
        %v2457 = vpop.f32.mrb[0].mxu0
        %v2458 = vpop.f32.mrb[0].mxu0
        %v2459 = vadd.f32 %v2247, %v2458
        %v2460 = vpop.f32.mrb[0].mxu0
        %2461 = vmatprep.mubr.bf16.mxu0 0
        %2462 = vmatmul.mubr.bf16.gmra.mrb[0].mxu0 %v2308
        %v2463 = vpop.f32.mrb[0].mxu0
        %v2464 = vadd.f32 %v2247, %v2463
        %v2465 = vpop.f32.mrb[0].mxu0
        %v2466 = vpop.f32.mrb[0].mxu0
        %v2467 = vadd.f32 %v2247, %v2466
        %v2468 = vpop.f32.mrb[0].mxu0
        %2469 = vmatprep.mubr.bf16.mxu0 0
        %2470 = vmatmul.mubr.bf16.gmra.mrb[0].mxu0 %v2311
        %v2471 = vpop.f32.mrb[0].mxu0
        %v2472 = vadd.f32 %v2247, %v2471
        %v2473 = vpop.f32.mrb[0].mxu0
        %v2474 = vpop.f32.mrb[0].mxu0
        %v2475 = vadd.f32 %v2247, %v2474
        %v2476 = vpop.f32.mrb[0].mxu0
        %2477 = vdwg.mxu0
        %v2478 = vmax.f32 %v2352, 0.0
        %v2479 = vmax.f32 %v2355, 0.0
        %v2480 = vmax.f32 %v2360, 0.0
        %v2481 = vmax.f32 %v2363, 0.0
        %v2482 = vmax.f32 %v2368, 0.0
        %v2483 = vmax.f32 %v2371, 0.0
        %v2484 = vmax.f32 %v2376, 0.0
        %v2485 = vmax.f32 %v2379, 0.0
        %v2486 = vmax.f32 %v2384, 0.0
        %v2487 = vmax.f32 %v2387, 0.0
        %v2488 = vmax.f32 %v2392, 0.0
        %v2489 = vmax.f32 %v2395, 0.0
        %v2490 = vmax.f32 %v2400, 0.0
        %v2491 = vmax.f32 %v2403, 0.0
        %v2492 = vmax.f32 %v2408, 0.0
        %v2493 = vmax.f32 %v2411, 0.0
        %v2494 = vmax.f32 %v2416, 0.0
        %v2495 = vmax.f32 %v2419, 0.0
        %v2496 = vmax.f32 %v2424, 0.0
        %v2497 = vmax.f32 %v2427, 0.0
        %v2498 = vmax.f32 %v2432, 0.0
        %v2499 = vmax.f32 %v2435, 0.0
        %v2500 = vmax.f32 %v2440, 0.0
        %v2501 = vmax.f32 %v2443, 0.0
        %v2502 = vmax.f32 %v2448, 0.0
        %v2503 = vmax.f32 %v2451, 0.0
        %v2504 = vmax.f32 %v2456, 0.0
        %v2505 = vmax.f32 %v2459, 0.0
        %v2506 = vmax.f32 %v2464, 0.0
        %v2507 = vmax.f32 %v2467, 0.0
        %v2508 = vmax.f32 %v2472, 0.0
        %v2509 = vmax.f32 %v2475, 0.0
        %v2510 = vadd.f32 %v2478, %v244
        %v2511 = vadd.f32 %v2479, %v245
        %v2512 = vadd.f32 %v2480, %v246
        %v2513 = vadd.f32 %v2481, %v247
        %v2514 = vadd.f32 %v2482, %v248
        %v2515 = vadd.f32 %v2483, %v249
        %v2516 = vadd.f32 %v2484, %v250
        %v2517 = vadd.f32 %v2485, %v251
        %v2518 = vadd.f32 %v2486, %v252
        %v2519 = vadd.f32 %v2487, %v253
        %v2520 = vadd.f32 %v2488, %v254
        %v2521 = vadd.f32 %v2489, %v255
        %v2522 = vadd.f32 %v2490, %v256
        %v2523 = vadd.f32 %v2491, %v257
        %v2524 = vadd.f32 %v2492, %v258
        %v2525 = vadd.f32 %v2493, %v259
        %v2526 = vadd.f32 %v2494, %v260
        %v2527 = vadd.f32 %v2495, %v261
        %v2528 = vadd.f32 %v2496, %v262
        %v2529 = vadd.f32 %v2497, %v263
        %v2530 = vadd.f32 %v2498, %v264
        %v2531 = vadd.f32 %v2499, %v265
        %v2532 = vadd.f32 %v2500, %v266
        %v2533 = vadd.f32 %v2501, %v267
        %v2534 = vadd.f32 %v2502, %v268
        %v2535 = vadd.f32 %v2503, %v269
        %v2536 = vadd.f32 %v2504, %v270
        %v2537 = vadd.f32 %v2505, %v271
        %v2538 = vadd.f32 %v2506, %v272
        %v2539 = vadd.f32 %v2507, %v273
        %v2540 = vadd.f32 %v2508, %v274
        %v2541 = vadd.f32 %v2509, %v275
        %2542 = vst.msk [vmem:[%s242] sm:$0xff] %vm315, %v2510
        %2543 = vst.msk [vmem:[%s242 + $0x8] sm:$0xff] %vm315, %v2511
        %2544 = vst.msk [vmem:[%s242 + $0x10] sm:$0xff] %vm315, %v2512
        %2545 = vst.msk [vmem:[%s242 + $0x18] sm:$0xff] %vm315, %v2513
        %2546 = vst.msk [vmem:[%s242 + $0x20] sm:$0xff] %vm315, %v2514
        %2547 = vst.msk [vmem:[%s242 + $0x28] sm:$0xff] %vm315, %v2515
        %2548 = vst.msk [vmem:[%s242 + $0x30] sm:$0xff] %vm315, %v2516
        %2549 = vst.msk [vmem:[%s242 + $0x38] sm:$0xff] %vm315, %v2517
        %2550 = vst.msk [vmem:[%s242 + $0x40] sm:$0xff] %vm315, %v2518
        %2551 = vst.msk [vmem:[%s242 + $0x48] sm:$0xff] %vm315, %v2519
        %2552 = vst.msk [vmem:[%s242 + $0x50] sm:$0xff] %vm315, %v2520
        %2553 = vst.msk [vmem:[%s242 + $0x58] sm:$0xff] %vm315, %v2521
        %2554 = vst.msk [vmem:[%s242 + $0x60] sm:$0xff] %vm315, %v2522
        %2555 = vst.msk [vmem:[%s242 + $0x68] sm:$0xff] %vm315, %v2523
        %2556 = vst.msk [vmem:[%s242 + $0x70] sm:$0xff] %vm315, %v2524
        %2557 = vst.msk [vmem:[%s242 + $0x78] sm:$0xff] %vm315, %v2525
        %2558 = vst.msk [vmem:[%s242 + $0x80] sm:$0xff] %vm315, %v2526
        %2559 = vst.msk [vmem:[%s242 + $0x88] sm:$0xff] %vm315, %v2527
        %2560 = vst.msk [vmem:[%s242 + $0x90] sm:$0xff] %vm315, %v2528
        %2561 = vst.msk [vmem:[%s242 + $0x98] sm:$0xff] %vm315, %v2529
        %2562 = vst.msk [vmem:[%s242 + $0xa0] sm:$0xff] %vm315, %v2530
        %2563 = vst.msk [vmem:[%s242 + $0xa8] sm:$0xff] %vm315, %v2531
        %2564 = vst.msk [vmem:[%s242 + $0xb0] sm:$0xff] %vm315, %v2532
        %2565 = vst.msk [vmem:[%s242 + $0xb8] sm:$0xff] %vm315, %v2533
        %2566 = vst.msk [vmem:[%s242 + $0xc0] sm:$0xff] %vm315, %v2534
        %2567 = vst.msk [vmem:[%s242 + $0xc8] sm:$0xff] %vm315, %v2535
        %2568 = vst.msk [vmem:[%s242 + $0xd0] sm:$0xff] %vm315, %v2536
        %2569 = vst.msk [vmem:[%s242 + $0xd8] sm:$0xff] %vm315, %v2537
        %2570 = vst.msk [vmem:[%s242 + $0xe0] sm:$0xff] %vm315, %v2538
        %2571 = vst.msk [vmem:[%s242 + $0xe8] sm:$0xff] %vm315, %v2539
        %2572 = vst.msk [vmem:[%s242 + $0xf0] sm:$0xff] %vm315, %v2540
        %2573 = vst.msk [vmem:[%s242 + $0xf8] sm:$0xff] %vm315, %v2541
        %s2574 = sand.u32 %s140, 1
        %s2575 = scalar_lea.sflag [#allocation5], %s2574
        %s2576 = sand.u32 %s140, 1
        %s2577 = smul.addr %s2576, 256
        %s2578 = scalar_lea.vmem [#allocation6], %s2577
        // Predicated region
        $region45: #{tpu_custom_call.1} parent=39 // pred_check
          %p2579 = pneg %p150
        $region46: #{tpu_custom_call.1} parent=39 // pred_check_branch
          %2581 = sbr.rel (%p2579) target = $region48
        $region47: #{tpu_custom_call.1} parent=39 // pred_region
          %s2583 = ssub.s32 4096, 4096
          %2584 = vsyncadd %s2575, %s2583
          %s2585 = smul.addr %s22, 32
          %s2586 = smul.addr %s2585, 128
          %s2587 = scalar_lea.hbm %s5, %s2586
          %s2588 = sshll.u32 %s2578, 4
          %s2589 = int_to_ptr.vmem [resolvable:$true] %s2588
          %2594 = dma.vmem_to_hbm [thread:$0]  %s2589, 4096, %s2587, %s2575, 128, 128, 8
        $region48: #{tpu_custom_call.1} parent=39 // pred_fallthru
          _
      $region40: #{tpu_custom_call.1} parent=5 // pred_fallthru
        _
      %p2595 = scmp.le.s32.totalorder 2, %s17
      // Predicated region
      $region49: #{tpu_custom_call.1} parent=5 // pred_check
        %p2596 = pneg %p2595
      $region50: #{tpu_custom_call.1} parent=5 // pred_check_branch
        %2598 = sbr.rel (%p2596) target = $region52
      $region51: #{tpu_custom_call.1} parent=5 // pred_region
        %s2599 = ssub.s32 %s17, 2
        // Predicated region
        $region53: #{tpu_custom_call.1} parent=51 // pred_check
          %p2600 = pneg %p156
        $region54: #{tpu_custom_call.1} parent=51 // pred_check_branch
          %2602 = sbr.rel (%p2600) target = $region56
        $region55: #{tpu_custom_call.1} parent=51 // pred_region
          %s2603 = sand.u32 %s141, 1
          %s2604 = scalar_lea.sflag [#allocation5], %s2603
          %s2605 = sand.u32 %s141, 1
          %s2606 = smul.addr %s2605, 256
          %s2607 = scalar_lea.vmem [#allocation6], %s2606
          %2608 = dma.done %s2604, 4096
        $region56: #{tpu_custom_call.1} parent=51 // pred_fallthru
          _
      $region52: #{tpu_custom_call.1} parent=5 // pred_fallthru
        _
    $region6: #{tpu_custom_call.1} parent=1 // loop_footer
      %s21 = sadd.s32 1, %s17
    $region7: #{tpu_custom_call.1} parent=1 // loop_footer_branch
      %16 = sbr.rel target = $region3
    $region8: #{tpu_custom_call.1} parent=1 // loop_exit
      _
    %2609 = vsyncpa [#allocation4], 1
    %s2610 = scalar_lea.sflag [#allocation4], 1
    %2611 = vsyncpa %s2610, 1
    %2612 = vsyncpa [#allocation5], 1
    %s2613 = scalar_lea.sflag [#allocation5], 1
    %2614 = vsyncpa %s2613, 1

</llo_original>
